<compile_context>
chip_gen: v5e
topology: v5e:2x2
jax: 0.10.0
libtpu: 0.0.40
codegen_flags: <defaults>
</compile_context>

<pallas_src>
import functools
import math

import jax
import jax.numpy as jnp
from jax.experimental import pallas as pl
from jax.experimental.pallas import tpu as pltpu

F_PAD = 128  # lane-padded width for every feature / hidden / class dim


# ---------------------------------------------------------------------------
# Per-generation tiling / VMEM selection
# ---------------------------------------------------------------------------

def _device_kind():
    try:
        return jax.devices()[0].device_kind.lower()
    except Exception:  # pragma: no cover - defensive, e.g. no devices visible
        return ""


@functools.lru_cache(maxsize=None)
def _compiler_params():
    kind = _device_kind()
    if "v7" in kind:                       # v7x: 64 MiB physical VMEM per TensorCore
        vmem = 56 * 1024 * 1024
    elif "v5" in kind or "v6" in kind:     # v5e / v6e: 128 MiB physical VMEM
        vmem = 96 * 1024 * 1024
    else:                                  # unknown chip: stay conservative
        vmem = 48 * 1024 * 1024
    return pltpu.CompilerParams(
        # Row tiles are independent -> megacore-shardable; K axis owns the accumulator.
        dimension_semantics=("parallel", "arbitrary"),
        vmem_limit_bytes=vmem,
    )


def default_tiles():
    """Per-generation (tm, tk) defaults for the K-tiled aggregation."""
    kind = _device_kind()
    if "v7" in kind:
        return 512, 2048   # A tile 2 MiB bf16 (x2 buffers), H tile 512 KiB (x2) -> < 56 MiB
    return 512, 1024       # v5e / v6e: big DMA blocks, tiny vs 128 MiB VMEM


# ---------------------------------------------------------------------------
# Kernels
# ---------------------------------------------------------------------------

def _gcn_conv_kernel(a_ref, h_ref, w_ref, b_ref, o_ref, acc_ref):
    """One GCNConv layer, K-tiled: o = tanh((sum_k A[i,k] @ H[k]) @ W + b)."""
    k = pl.program_id(1)

    @pl.when(k == 0)
    def _():
        acc_ref[...] = jnp.zeros_like(acc_ref)

    # bf16 x bf16 -> f32 MXU accumulation of the aggregation partial sum.
    acc_ref[...] += jnp.dot(a_ref[...], h_ref[...], preferred_element_type=jnp.float32)

    @pl.when(k == pl.num_programs(1) - 1)
    def _():
        z = jnp.dot(acc_ref[...], w_ref[...], preferred_element_type=jnp.float32) + b_ref[...]
        o_ref[...] = jnp.tanh(z).astype(o_ref.dtype)


def _gcn_final_kernel(a_ref, h_ref, w3_ref, b3_ref, wc_ref, bc_ref,
                      out_ref, h3_ref, acc_ref):
    """conv3 (+tanh) fused with the Linear classifier, K-tiled aggregation."""
    k = pl.program_id(1)

    @pl.when(k == 0)
    def _():
        acc_ref[...] = jnp.zeros_like(acc_ref)

    acc_ref[...] += jnp.dot(a_ref[...], h_ref[...], preferred_element_type=jnp.float32)

    @pl.when(k == pl.num_programs(1) - 1)
    def _():
        h3 = jnp.tanh(jnp.dot(acc_ref[...], w3_ref[...],
                              preferred_element_type=jnp.float32) + b3_ref[...])
        h3_ref[...] = h3
        out_ref[...] = (jnp.dot(h3, wc_ref[...], preferred_element_type=jnp.float32)
                        + bc_ref[...])


# ---------------------------------------------------------------------------
# pallas_call wrappers (row x K grid, lane-dense 128-wide blocks)
# ---------------------------------------------------------------------------

def _conv_layer_call(a_p, h_p, w_p, b_p, *, tm, tk, out_dtype):
    n_pad = a_p.shape[0]
    return pl.pallas_call(
        _gcn_conv_kernel,
        out_shape=jax.ShapeDtypeStruct((n_pad, F_PAD), out_dtype),
        grid=(n_pad // tm, n_pad // tk),
        in_specs=[
            pl.BlockSpec((tm, tk), lambda i, k: (i, k)),        # A_hat tile (bf16)
            pl.BlockSpec((tk, F_PAD), lambda i, k: (k, 0)),     # activations K-slab (bf16)
            # W / bias are grid-invariant and tiny (<=64 KiB); the cost of their default
            # double buffer is negligible, so pl.Buffered(1) plumbing is intentionally skipped.
            pl.BlockSpec((F_PAD, F_PAD), lambda i, k: (0, 0)),  # weight (f32, padded)
            pl.BlockSpec((1, F_PAD), lambda i, k: (0, 0)),      # bias   (f32, padded)
        ],
        out_specs=pl.BlockSpec((tm, F_PAD), lambda i, k: (i, 0)),
        scratch_shapes=[pltpu.VMEM((tm, F_PAD), jnp.float32)],
        compiler_params=_compiler_params(),
    )(a_p, h_p, w_p, b_p)


def _final_layer_call(a_p, h_p, w3_p, b3_p, wc_p, bc_p, *, tm, tk):
    n_pad = a_p.shape[0]
    return pl.pallas_call(
        _gcn_final_kernel,
        out_shape=(
            jax.ShapeDtypeStruct((n_pad, F_PAD), jnp.float32),   # classifier out (padded)
            jax.ShapeDtypeStruct((n_pad, F_PAD), jnp.float32),   # embedding h    (padded)
        ),
        grid=(n_pad // tm, n_pad // tk),
        in_specs=[
            pl.BlockSpec((tm, tk), lambda i, k: (i, k)),
            pl.BlockSpec((tk, F_PAD), lambda i, k: (k, 0)),
            pl.BlockSpec((F_PAD, F_PAD), lambda i, k: (0, 0)),
            pl.BlockSpec((1, F_PAD), lambda i, k: (0, 0)),
            pl.BlockSpec((F_PAD, F_PAD), lambda i, k: (0, 0)),
            pl.BlockSpec((1, F_PAD), lambda i, k: (0, 0)),
        ],
        out_specs=(
            pl.BlockSpec((tm, F_PAD), lambda i, k: (i, 0)),
            pl.BlockSpec((tm, F_PAD), lambda i, k: (i, 0)),
        ),
        scratch_shapes=[pltpu.VMEM((tm, F_PAD), jnp.float32)],
        compiler_params=_compiler_params(),
    )(a_p, h_p, w3_p, b3_p, wc_p, bc_p)


# ---------------------------------------------------------------------------
# Forward pass
# ---------------------------------------------------------------------------

def _pad2d(x, rows, cols, dtype=None):
    dtype = x.dtype if dtype is None else dtype
    out = jnp.zeros((rows, cols), dtype)
    return out.at[: x.shape[0], : x.shape[1]].set(x.astype(dtype))


@functools.partial(jax.jit, static_argnames=("tm", "tk"))
def _gcn_forward_impl(a_p, x, params, *, tm, tk):
    (w1, b1), (w2, b2), (w3, b3), (wc, bc) = params
    n_pad = a_p.shape[0]
    n = x.shape[0]
    num_classes = wc.shape[1]
    emb_dim = w3.shape[1]

    # Static shape / tiling sanity checks (review correctness concern: F_PAD assumptions).
    assert a_p.shape == (n_pad, n_pad), "A_hat must be pre-padded square"
    assert n <= n_pad, "x has more rows than the padded adjacency"
    assert n_pad % tm == 0 and n_pad % tk == 0, "n_pad must be a multiple of tm and tk"
    assert tm % 16 == 0, "row tile must be a multiple of 16 (bf16 sublane packing)"
    assert tk % 128 == 0, "K tile must be a multiple of 128 (lane dim of the A block)"
    assert x.shape[1] <= F_PAD, "num_features must be <= F_PAD"
    for (w, b) in ((w1, b1), (w2, b2), (w3, b3), (wc, bc)):
        assert w.shape[0] <= F_PAD and w.shape[1] <= F_PAD and b.shape[1] <= F_PAD, \
            "all layer dims must be <= F_PAD (128)"

    # Lane-pad small per-call operands; activations stream in bf16, weights/biases in f32.
    # Zero node padding is safe: padded A rows/cols are zero, so padded nodes never
    # contribute to real rows; padded feature lanes stay exactly zero through all layers.
    x_p = _pad2d(x, n_pad, F_PAD, jnp.bfloat16)
    w1p, b1p = _pad2d(w1, F_PAD, F_PAD), _pad2d(b1, 1, F_PAD)
    w2p, b2p = _pad2d(w2, F_PAD, F_PAD), _pad2d(b2, 1, F_PAD)
    w3p, b3p = _pad2d(w3, F_PAD, F_PAD), _pad2d(b3, 1, F_PAD)
    wcp, bcp = _pad2d(wc, F_PAD, F_PAD), _pad2d(bc, 1, F_PAD)

    h1 = _conv_layer_call(a_p, x_p, w1p, b1p, tm=tm, tk=tk, out_dtype=jnp.bfloat16)
    h2 = _conv_layer_call(a_p, h1, w2p, b2p, tm=tm, tk=tk, out_dtype=jnp.bfloat16)
    out_p, h3_p = _final_layer_call(a_p, h2, w3p, b3p, wcp, bcp, tm=tm, tk=tk)

    return out_p[:n, :num_classes], h3_p[:n, :emb_dim]


def gcn_forward(a_p, x, params, *, tm=None, tk=None):
    """Pallas GCN forward.  `a_p` is the pre-padded bf16 [N_pad, N_pad] normalized
    adjacency (built once via `pad_adjacency`); returns (out [N, C], embedding h [N, 2])."""
    if tm is None or tk is None:
        dtm, dtk = default_tiles()
        tm = dtm if tm is None else tm
        tk = dtk if tk is None else tk
    return _gcn_forward_impl(a_p, x, params, tm=tm, tk=tk)


# ---------------------------------------------------------------------------
# Graph / params construction + references (plain JAX glue)
# ---------------------------------------------------------------------------

def padded_num_nodes(num_nodes, tm, tk):
    mult = math.lcm(tm, tk)
    return max(mult, ((num_nodes + mult - 1) // mult) * mult)


def build_normalized_adjacency(edge_index, num_nodes):
    """Dense A_hat = D^-1/2 (A + I) D^-1/2 (GCNConv propagation with self-loops), f32."""
    # TODO(synk): for genuinely sparse graphs a scalar-prefetch gather / CSR kernel would
    # avoid densifying to N^2; dense propagation keeps the toy example simple.
    src, dst = edge_index[0], edge_index[1]
    a = jnp.zeros((num_nodes, num_nodes), jnp.float32)
    a = a.at[dst, src].add(1.0)
    a = a + jnp.eye(num_nodes, dtype=jnp.float32)
    deg = jnp.sum(a, axis=1)
    d_inv_sqrt = jnp.where(deg > 0, 1.0 / jnp.sqrt(deg), 0.0)
    return a * d_inv_sqrt[:, None] * d_inv_sqrt[None, :]


def pad_adjacency(a_hat, n_pad, dtype=jnp.bfloat16):
    """Pad + cast A_hat once, OUTSIDE the jitted forward (reuse across forward calls)."""
    # TODO(synk): on v7x an fp8(e4m3) A (int8+scale on v5e/v6e) would halve the dominant
    # HBM stream again; kept bf16 here to keep accuracy validation simple.
    return _pad2d(jnp.asarray(a_hat), n_pad, n_pad, dtype)


def init_params(key, num_features, num_classes):
    """Deterministic synthetic parameter init (shapes match the PyTorch module)."""
    dims = [(num_features, 4), (4, 4), (4, 2), (2, num_classes)]
    params = []
    for fin, fout in dims:
        key, kw, kb = jax.random.split(key, 3)
        scale = 1.0 / jnp.sqrt(jnp.float32(fin))
        w = jax.random.uniform(kw, (fin, fout), jnp.float32, -scale, scale)
        b = jax.random.uniform(kb, (1, fout), jnp.float32, -scale, scale)
        params.append((w, b))
    return params


def reference_forward_f32(a_hat, x, params):
    """Pure f32 math reference (module semantics)."""
    (w1, b1), (w2, b2), (w3, b3), (wc, bc) = params
    h = jnp.tanh(a_hat @ (x @ w1) + b1)
    h = jnp.tanh(a_hat @ (h @ w2) + b2)
    h = jnp.tanh(a_hat @ (h @ w3) + b3)
    return h @ wc + bc, h


def reference_forward_bf16(a_hat, x, params):
    """Reference mirroring the kernel's bf16-input / f32-accumulate numerics."""
    (w1, b1), (w2, b2), (w3, b3), (wc, bc) = params
    a = a_hat.astype(jnp.bfloat16)

    def conv(h, w, b):
        agg = jnp.dot(a, h.astype(jnp.bfloat16), preferred_element_type=jnp.float32)
        return jnp.tanh(jnp.dot(agg, w, preferred_element_type=jnp.float32) + b)

    h = conv(x, w1, b1).astype(jnp.bfloat16)
    h = conv(h, w2, b2).astype(jnp.bfloat16)
    h3 = conv(h, w3, b3)
    out = jnp.dot(h3, wc, preferred_element_type=jnp.float32) + bc
    return out, h3


if __name__ == "__main__":
    key = jax.random.PRNGKey(0)

    num_nodes = 200       # small, but > tiles so the (row, K) grid has several steps
    num_features = 4
    num_classes = 4
    tm, tk = 64, 128      # small tiles for the toy graph; real graphs use default_tiles()

    key, kx = jax.random.split(key)
    x = jax.random.normal(kx, (num_nodes, num_features), jnp.float32)

    # Undirected ring graph (both edge directions), like a toy PyG edge_index [2, E].
    src = jnp.arange(num_nodes, dtype=jnp.int32)
    dst = (src + 1) % num_nodes
    edge_index = jnp.stack(
        [jnp.concatenate([src, dst]), jnp.concatenate([dst, src])], axis=0
    )

    a_hat = build_normalized_adjacency(edge_index, num_nodes)        # f32 (references)
    n_pad = padded_num_nodes(num_nodes, tm, tk)                      # -> 256, grid (4, 2)
    a_p = pad_adjacency(a_hat, n_pad)                                # bf16, built ONCE

    params = init_params(key, num_features, num_classes)

    out, h = gcn_forward(a_p, x, params, tm=tm, tk=tk)
    jax.block_until_ready((out, h))

    assert out.shape == (num_nodes, num_classes)
    assert h.shape == (num_nodes, 2)

    # Strict check vs. a reference that mirrors the kernel's bf16/f32 numerics.
    out_bf, h_bf = reference_forward_bf16(a_hat, x, params)
    assert jnp.allclose(out, out_bf, atol=1e-3), "classifier output mismatch (bf16 ref)"
    assert jnp.allclose(h, h_bf, atol=1e-3), "embedding mismatch (bf16 ref)"

    # Loose check vs. pure f32 math (bounds the bf16 quantization error).
    out_f32, h_f32 = reference_forward_f32(a_hat, x, params)
    assert jnp.allclose(out, out_f32, atol=5e-2), "classifier output drift vs f32 ref"
    assert jnp.allclose(h, h_f32, atol=5e-2), "embedding drift vs f32 ref"

    print("KERNEL_OK")
</pallas_src>

<mosaic_0001>
module attributes {stable_mosaic.version = 11 : i64} {
  func.func @_gcn_conv_kernel(%arg0: i32, %arg1: i32, %arg2: memref<64x128xbf16, #tpu.memory_space<vmem>>, %arg3: memref<128x128xbf16, #tpu.memory_space<vmem>>, %arg4: memref<128x128xf32, #tpu.memory_space<vmem>>, %arg5: memref<1x128xf32, #tpu.memory_space<vmem>>, %arg6: memref<64x128xbf16, #tpu.memory_space<vmem>>, %arg7: memref<64x128xf32, #tpu.memory_space<vmem>>) attributes {dimension_semantics = [#tpu.dimension_semantics<parallel>, #tpu.dimension_semantics<arbitrary>], iteration_bounds = array<i64: 4, 2>, scalar_prefetch = 0 : i64, scratch_operands = 1 : i64, tpu.core_type = #tpu.core_type<tc>, window_params = [{transform_indices = @transform_0, window_bounds = array<i64: 64, 128>}, {transform_indices = @transform_1, window_bounds = array<i64: 128, 128>}, {pipeline_mode = #tpu.pipeline_mode<synchronous>, transform_indices = @transform_2, window_bounds = array<i64: 128, 128>}, {pipeline_mode = #tpu.pipeline_mode<synchronous>, transform_indices = @transform_3, window_bounds = array<i64: 1, 128>}, {transform_indices = @transform_4, window_bounds = array<i64: 64, 128>}]} {
    %c0_i32 = arith.constant 0 : i32
    %0 = arith.cmpi eq, %arg1, %c0_i32 : i32
    %1 = arith.extui %0 : i1 to i32
    %c0_i32_0 = arith.constant 0 : i32
    %2 = arith.cmpi ne, %1, %c0_i32_0 : i32
    scf.if %2 {
      %cst_9 = arith.constant 0.000000e+00 : f32
      %12 = vector.broadcast %cst_9 : f32 to vector<64x128xf32>
      %c0_10 = arith.constant 0 : index
      %c0_11 = arith.constant 0 : index
      %13 = vector.load %arg7[%c0_10, %c0_11] : memref<64x128xf32, #tpu.memory_space<vmem>>, vector<64x128xf32>
      tpu.vector_store %arg7[%c0_10, %c0_11], %12 {strides = array<i32>} : memref<64x128xf32, #tpu.memory_space<vmem>>, vector<64x128xf32>,
    } else {
    }
    %c0 = arith.constant 0 : index
    %c0_1 = arith.constant 0 : index
    %3 = vector.load %arg7[%c0, %c0_1] : memref<64x128xf32, #tpu.memory_space<vmem>>, vector<64x128xf32>
    %c0_2 = arith.constant 0 : index
    %c0_3 = arith.constant 0 : index
    %4 = vector.load %arg2[%c0_2, %c0_3] : memref<64x128xbf16, #tpu.memory_space<vmem>>, vector<64x128xbf16>
    %c0_4 = arith.constant 0 : index
    %c0_5 = arith.constant 0 : index
    %5 = vector.load %arg3[%c0_4, %c0_5] : memref<128x128xbf16, #tpu.memory_space<vmem>>, vector<128x128xbf16>
    %cst = arith.constant dense<0.000000e+00> : vector<64x128xf32>
    %6 = tpu.matmul %4, %5, %cst {dimension_numbers = #tpu.dot_dimension_numbers<[1], [0], [0], [1], [0, 0, 1, 1], [], []>} : vector<64x128xbf16>, vector<128x128xbf16>, vector<64x128xf32> -> vector<64x128xf32>
    %7 = arith.addf %3, %6 : vector<64x128xf32>
    %c0_6 = arith.constant 0 : index
    %c0_7 = arith.constant 0 : index
    %8 = vector.load %arg7[%c0_6, %c0_7] : memref<64x128xf32, #tpu.memory_space<vmem>>, vector<64x128xf32>
    tpu.vector_store %arg7[%c0_6, %c0_7], %7 {strides = array<i32>} : memref<64x128xf32, #tpu.memory_space<vmem>>, vector<64x128xf32>,
    %c1_i32 = arith.constant 1 : i32
    %9 = arith.cmpi eq, %arg1, %c1_i32 : i32
    %10 = arith.extui %9 : i1 to i32
    %c0_i32_8 = arith.constant 0 : i32
    %11 = arith.cmpi ne, %10, %c0_i32_8 : i32
    scf.if %11 {
      %c0_9 = arith.constant 0 : index
      %c0_10 = arith.constant 0 : index
      %12 = vector.load %arg7[%c0_9, %c0_10] : memref<64x128xf32, #tpu.memory_space<vmem>>, vector<64x128xf32>
      %c0_11 = arith.constant 0 : index
      %c0_12 = arith.constant 0 : index
      %13 = vector.load %arg4[%c0_11, %c0_12] : memref<128x128xf32, #tpu.memory_space<vmem>>, vector<128x128xf32>
      %cst_13 = arith.constant dense<0.000000e+00> : vector<64x128xf32>
      %14 = tpu.matmul %12, %13, %cst_13 {dimension_numbers = #tpu.dot_dimension_numbers<[1], [0], [0], [1], [0, 0, 1, 1], [], []>} : vector<64x128xf32>, vector<128x128xf32>, vector<64x128xf32> -> vector<64x128xf32>
      %c0_14 = arith.constant 0 : index
      %c0_15 = arith.constant 0 : index
      %15 = vector.load %arg5[%c0_14, %c0_15] : memref<1x128xf32, #tpu.memory_space<vmem>>, vector<1x128xf32>
      %16 = vector.broadcast %15 : vector<1x128xf32> to vector<64x128xf32>
      %17 = arith.addf %14, %16 : vector<64x128xf32>
      %18 = math.tanh %17 : vector<64x128xf32>
      %19 = arith.truncf %18 : vector<64x128xf32> to vector<64x128xbf16>
      %c0_16 = arith.constant 0 : index
      %c0_17 = arith.constant 0 : index
      %20 = vector.load %arg6[%c0_16, %c0_17] : memref<64x128xbf16, #tpu.memory_space<vmem>>, vector<64x128xbf16>
      tpu.vector_store %arg6[%c0_16, %c0_17], %19 {strides = array<i32>} : memref<64x128xbf16, #tpu.memory_space<vmem>>, vector<64x128xbf16>,
    } else {
    }
    return
  }
  func.func @transform_0(%arg0: i32, %arg1: i32) -> (i32, i32) {
    %c0_i32 = arith.constant 0 : i32
    return %arg0, %arg1 : i32, i32
  }
  func.func @transform_1(%arg0: i32, %arg1: i32) -> (i32, i32) {
    %c0_i32 = arith.constant 0 : i32
    %c0_i32_0 = arith.constant 0 : i32
    return %arg1, %c0_i32 : i32, i32
  }
  func.func @transform_2(%arg0: i32, %arg1: i32) -> (i32, i32) {
    %c0_i32 = arith.constant 0 : i32
    %c0_i32_0 = arith.constant 0 : i32
    %c0_i32_1 = arith.constant 0 : i32
    return %c0_i32, %c0_i32_0 : i32, i32
  }
  func.func @transform_3(%arg0: i32, %arg1: i32) -> (i32, i32) {
    %c0_i32 = arith.constant 0 : i32
    %c0_i32_0 = arith.constant 0 : i32
    %c0_i32_1 = arith.constant 0 : i32
    return %c0_i32, %c0_i32_0 : i32, i32
  }
  func.func @transform_4(%arg0: i32, %arg1: i32) -> (i32, i32) {
    %c0_i32 = arith.constant 0 : i32
    %c0_i32_0 = arith.constant 0 : i32
    return %arg0, %c0_i32 : i32, i32
  }
}

module attributes {stable_mosaic.version = 11 : i64} {
  func.func @_gcn_final_kernel(%arg0: i32, %arg1: i32, %arg2: memref<64x128xbf16, #tpu.memory_space<vmem>>, %arg3: memref<128x128xbf16, #tpu.memory_space<vmem>>, %arg4: memref<128x128xf32, #tpu.memory_space<vmem>>, %arg5: memref<1x128xf32, #tpu.memory_space<vmem>>, %arg6: memref<128x128xf32, #tpu.memory_space<vmem>>, %arg7: memref<1x128xf32, #tpu.memory_space<vmem>>, %arg8: memref<64x128xf32, #tpu.memory_space<vmem>>, %arg9: memref<64x128xf32, #tpu.memory_space<vmem>>, %arg10: memref<64x128xf32, #tpu.memory_space<vmem>>) attributes {dimension_semantics = [#tpu.dimension_semantics<parallel>, #tpu.dimension_semantics<arbitrary>], iteration_bounds = array<i64: 4, 2>, scalar_prefetch = 0 : i64, scratch_operands = 1 : i64, tpu.core_type = #tpu.core_type<tc>, window_params = [{transform_indices = @transform_0, window_bounds = array<i64: 64, 128>}, {transform_indices = @transform_1, window_bounds = array<i64: 128, 128>}, {pipeline_mode = #tpu.pipeline_mode<synchronous>, transform_indices = @transform_2, window_bounds = array<i64: 128, 128>}, {pipeline_mode = #tpu.pipeline_mode<synchronous>, transform_indices = @transform_3, window_bounds = array<i64: 1, 128>}, {pipeline_mode = #tpu.pipeline_mode<synchronous>, transform_indices = @transform_4, window_bounds = array<i64: 128, 128>}, {pipeline_mode = #tpu.pipeline_mode<synchronous>, transform_indices = @transform_5, window_bounds = array<i64: 1, 128>}, {transform_indices = @transform_6, window_bounds = array<i64: 64, 128>}, {transform_indices = @transform_7, window_bounds = array<i64: 64, 128>}]} {
    %c0_i32 = arith.constant 0 : i32
    %0 = arith.cmpi eq, %arg1, %c0_i32 : i32
    %1 = arith.extui %0 : i1 to i32
    %c0_i32_0 = arith.constant 0 : i32
    %2 = arith.cmpi ne, %1, %c0_i32_0 : i32
    scf.if %2 {
      %cst_9 = arith.constant 0.000000e+00 : f32
      %12 = vector.broadcast %cst_9 : f32 to vector<64x128xf32>
      %c0_10 = arith.constant 0 : index
      %c0_11 = arith.constant 0 : index
      %13 = vector.load %arg10[%c0_10, %c0_11] : memref<64x128xf32, #tpu.memory_space<vmem>>, vector<64x128xf32>
      tpu.vector_store %arg10[%c0_10, %c0_11], %12 {strides = array<i32>} : memref<64x128xf32, #tpu.memory_space<vmem>>, vector<64x128xf32>,
    } else {
    }
    %c0 = arith.constant 0 : index
    %c0_1 = arith.constant 0 : index
    %3 = vector.load %arg10[%c0, %c0_1] : memref<64x128xf32, #tpu.memory_space<vmem>>, vector<64x128xf32>
    %c0_2 = arith.constant 0 : index
    %c0_3 = arith.constant 0 : index
    %4 = vector.load %arg2[%c0_2, %c0_3] : memref<64x128xbf16, #tpu.memory_space<vmem>>, vector<64x128xbf16>
    %c0_4 = arith.constant 0 : index
    %c0_5 = arith.constant 0 : index
    %5 = vector.load %arg3[%c0_4, %c0_5] : memref<128x128xbf16, #tpu.memory_space<vmem>>, vector<128x128xbf16>
    %cst = arith.constant dense<0.000000e+00> : vector<64x128xf32>
    %6 = tpu.matmul %4, %5, %cst {dimension_numbers = #tpu.dot_dimension_numbers<[1], [0], [0], [1], [0, 0, 1, 1], [], []>} : vector<64x128xbf16>, vector<128x128xbf16>, vector<64x128xf32> -> vector<64x128xf32>
    %7 = arith.addf %3, %6 : vector<64x128xf32>
    %c0_6 = arith.constant 0 : index
    %c0_7 = arith.constant 0 : index
    %8 = vector.load %arg10[%c0_6, %c0_7] : memref<64x128xf32, #tpu.memory_space<vmem>>, vector<64x128xf32>
    tpu.vector_store %arg10[%c0_6, %c0_7], %7 {strides = array<i32>} : memref<64x128xf32, #tpu.memory_space<vmem>>, vector<64x128xf32>,
    %c1_i32 = arith.constant 1 : i32
    %9 = arith.cmpi eq, %arg1, %c1_i32 : i32
    %10 = arith.extui %9 : i1 to i32
    %c0_i32_8 = arith.constant 0 : i32
    %11 = arith.cmpi ne, %10, %c0_i32_8 : i32
    scf.if %11 {
      %c0_9 = arith.constant 0 : index
      %c0_10 = arith.constant 0 : index
      %12 = vector.load %arg10[%c0_9, %c0_10] : memref<64x128xf32, #tpu.memory_space<vmem>>, vector<64x128xf32>
      %c0_11 = arith.constant 0 : index
      %c0_12 = arith.constant 0 : index
      %13 = vector.load %arg4[%c0_11, %c0_12] : memref<128x128xf32, #tpu.memory_space<vmem>>, vector<128x128xf32>
      %cst_13 = arith.constant dense<0.000000e+00> : vector<64x128xf32>
      %14 = tpu.matmul %12, %13, %cst_13 {dimension_numbers = #tpu.dot_dimension_numbers<[1], [0], [0], [1], [0, 0, 1, 1], [], []>} : vector<64x128xf32>, vector<128x128xf32>, vector<64x128xf32> -> vector<64x128xf32>
      %c0_14 = arith.constant 0 : index
      %c0_15 = arith.constant 0 : index
      %15 = vector.load %arg5[%c0_14, %c0_15] : memref<1x128xf32, #tpu.memory_space<vmem>>, vector<1x128xf32>
      %16 = vector.broadcast %15 : vector<1x128xf32> to vector<64x128xf32>
      %17 = arith.addf %14, %16 : vector<64x128xf32>
      %18 = math.tanh %17 : vector<64x128xf32>
      %c0_16 = arith.constant 0 : index
      %c0_17 = arith.constant 0 : index
      %19 = vector.load %arg9[%c0_16, %c0_17] : memref<64x128xf32, #tpu.memory_space<vmem>>, vector<64x128xf32>
      tpu.vector_store %arg9[%c0_16, %c0_17], %18 {strides = array<i32>} : memref<64x128xf32, #tpu.memory_space<vmem>>, vector<64x128xf32>,
      %c0_18 = arith.constant 0 : index
      %c0_19 = arith.constant 0 : index
      %20 = vector.load %arg6[%c0_18, %c0_19] : memref<128x128xf32, #tpu.memory_space<vmem>>, vector<128x128xf32>
      %cst_20 = arith.constant dense<0.000000e+00> : vector<64x128xf32>
      %21 = tpu.matmul %18, %20, %cst_20 {dimension_numbers = #tpu.dot_dimension_numbers<[1], [0], [0], [1], [0, 0, 1, 1], [], []>} : vector<64x128xf32>, vector<128x128xf32>, vector<64x128xf32> -> vector<64x128xf32>
      %c0_21 = arith.constant 0 : index
      %c0_22 = arith.constant 0 : index
      %22 = vector.load %arg7[%c0_21, %c0_22] : memref<1x128xf32, #tpu.memory_space<vmem>>, vector<1x128xf32>
      %23 = vector.broadcast %22 : vector<1x128xf32> to vector<64x128xf32>
      %24 = arith.addf %21, %23 : vector<64x128xf32>
      %c0_23 = arith.constant 0 : index
      %c0_24 = arith.constant 0 : index
      %25 = vector.load %arg8[%c0_23, %c0_24] : memref<64x128xf32, #tpu.memory_space<vmem>>, vector<64x128xf32>
      tpu.vector_store %arg8[%c0_23, %c0_24], %24 {strides = array<i32>} : memref<64x128xf32, #tpu.memory_space<vmem>>, vector<64x128xf32>,
    } else {
    }
    return
  }
  func.func @transform_0(%arg0: i32, %arg1: i32) -> (i32, i32) {
    %c0_i32 = arith.constant 0 : i32
    return %arg0, %arg1 : i32, i32
  }
  func.func @transform_1(%arg0: i32, %arg1: i32) -> (i32, i32) {
    %c0_i32 = arith.constant 0 : i32
    %c0_i32_0 = arith.constant 0 : i32
    return %arg1, %c0_i32 : i32, i32
  }
  func.func @transform_2(%arg0: i32, %arg1: i32) -> (i32, i32) {
    %c0_i32 = arith.constant 0 : i32
    %c0_i32_0 = arith.constant 0 : i32
    %c0_i32_1 = arith.constant 0 : i32
    return %c0_i32, %c0_i32_0 : i32, i32
  }
  func.func @transform_3(%arg0: i32, %arg1: i32) -> (i32, i32) {
    %c0_i32 = arith.constant 0 : i32
    %c0_i32_0 = arith.constant 0 : i32
    %c0_i32_1 = arith.constant 0 : i32
    return %c0_i32, %c0_i32_0 : i32, i32
  }
  func.func @transform_4(%arg0: i32, %arg1: i32) -> (i32, i32) {
    %c0_i32 = arith.constant 0 : i32
    %c0_i32_0 = arith.constant 0 : i32
    %c0_i32_1 = arith.constant 0 : i32
    return %c0_i32, %c0_i32_0 : i32, i32
  }
  func.func @transform_5(%arg0: i32, %arg1: i32) -> (i32, i32) {
    %c0_i32 = arith.constant 0 : i32
    %c0_i32_0 = arith.constant 0 : i32
    %c0_i32_1 = arith.constant 0 : i32
    return %c0_i32, %c0_i32_0 : i32, i32
  }
  func.func @transform_6(%arg0: i32, %arg1: i32) -> (i32, i32) {
    %c0_i32 = arith.constant 0 : i32
    %c0_i32_0 = arith.constant 0 : i32
    return %arg0, %c0_i32 : i32, i32
  }
  func.func @transform_7(%arg0: i32, %arg1: i32) -> (i32, i32) {
    %c0_i32 = arith.constant 0 : i32
    %c0_i32_0 = arith.constant 0 : i32
    return %arg0, %c0_i32 : i32, i32
  }
}

</mosaic_0001>

<llo_original>
// kernel: _gcn_forward_impl.5
$region0: #{_gcn_forward_impl.5}
  #allocation0 [shape = 'u32[]', space=smem, size = 0x4, offset = 0x4, fixed_abs, tag = 'smem constant byte address 0x4 - core index']
  #allocation1 [shape = 'u32[72,128]{1,0:T(1,128)}', space=vmem, size = 0x9000, scoped, tag = 'internal scratch']
  #allocation2 [shape = 'f32[64,128]{1,0:T(8,128)}', space=vmem, size = 0x8000, scoped, tag = 'scratch operand']
  %s0 = inlined_call_operand.vmem [shape: bf16[256,256], index: 0, kind: input, shape index: {}]
  %s1 = inlined_call_operand.vmem [shape: bf16[256,128], index: 1, kind: input, shape index: {}]
  %s2 = inlined_call_operand.vmem [shape: f32[128,128], index: 2, kind: input, shape index: {}]
  %s3 = inlined_call_operand.vmem [shape: f32[1,128], index: 3, kind: input, shape index: {}]
  %s4 = inlined_call_operand.vmem [shape: f32[128,128], index: 4, kind: input, shape index: {}]
  %s5 = inlined_call_operand.vmem [shape: f32[1,128], index: 5, kind: input, shape index: {}]
  %s6 = inlined_call_operand.vmem [shape: f32[256,128], index: 6, kind: output, shape index: {0}]
  %s7 = inlined_call_operand.vmem [shape: f32[256,128], index: 7, kind: output, shape index: {1}]
  %8 = xla_tuple %s6, %s7
  %s9 = sld [smem:[#allocation0]]
  $region114: #{_gcn_forward_impl.5} parent=0
    _
  %s11 = ssub.s32 1, %s9
  %s12 = scalar_select 0, %s11, %s9
  $region1: #{_gcn_forward_impl.5} parent=0
    #allocation3 [shape = 'u8[32768]{0}', space=vmem, size = 0x8000, scoped, tag = 'input window, operand 0']
    loop: start=0, step=1, limit=10
    $region2: #{_gcn_forward_impl.5} parent=1 // loop_pre_header
      _
    $region3: #{_gcn_forward_impl.5} parent=1 // loop_header
      %s14 = sphi 0, %s18
      %p15 = scmp.ge.s32.totalorder %s14, 10
      %s21 = sphi 0, %s33
      %s22 = sphi 0, %s29
      %s23 = sphi 0, %s21
      %s24 = sphi 0, %s22
      %s25 = sphi 0, %s23
      %s26 = sphi 0, %s24
      %s38 = sphi 0, %s40
      %s41 = sphi 0, %s38
      %s42 = sphi 0, %s41
      %s58 = sphi 0, %s42
      %s64 = sphi 0, %s66
      %s67 = sphi 0, %s64
      %s68 = sphi 0, %s67
      %s84 = sphi 0, %s68
      %s88 = sphi 0, %s88
      %s90 = sphi 0, %s88
      %s91 = sphi 0, %s90
      %s105 = sphi 0, %s91
      %s109 = sphi 0, %s109
      %s111 = sphi 0, %s109
      %s112 = sphi 0, %s111
      %s126 = sphi 0, %s112
      %s130 = sphi 0, %s130
      %s132 = sphi 0, %s130
      %s133 = sphi 0, %s132
      %s147 = sphi 0, %s133
      %s151 = sphi 0, %s151
      %s153 = sphi 0, %s151
      %s154 = sphi 0, %s153
      %s168 = sphi 0, %s154
      %s174 = sphi 0, %s176
      %s177 = sphi 0, %s174
      %s178 = sphi 0, %s177
      %s194 = sphi 0, %s178
      %s200 = sphi 0, %s202
      %s203 = sphi 0, %s200
      %s204 = sphi 0, %s203
      %s220 = sphi 0, %s204
    $region4: #{_gcn_forward_impl.5} parent=1 // loop_header_branch
      %17 = sbr.rel (%p15) target = $region8
    $region5: #{_gcn_forward_impl.5} parent=1 // loop_body
      %s19 = ssub.s32 %s14, 1
      %s20 = ssub.s32 %s14, 2
      %s27 = sadd.s32 1, %s22
      %p28 = scmp.ge.s32.totalorder %s27, 2
      %s29 = scalar_select %p28, 0, %s27
      %s30 = sadd.s32 1, %s21
      %s31 = scalar_select %p28, %s30, %s21
      %p32 = scmp.ge.s32.totalorder %s31, 4
      %s33 = scalar_select %p32, 0, %s31
      %s34 = ssub.s32 %s21, %s33
      %s35 = ssub.s32 %s22, %s29
      %s36 = sor.u32 %s34, %s35
      %p37 = scmp.eq.s32.totalorder %s36, 0
      %s39 = sadd.s32 %s38, 1
      %s40 = scalar_select %p37, %s38, %s39
      %p43 = pneg %p37
      %p44 = scmp.eq.s32.totalorder %s14, 7
      %p45 = por %p43, %p44
      %p46 = scmp.ne.s32.totalorder %s38, %s41
      %p47 = scmp.eq.s32.totalorder %s14, 0
      %p48 = por %p46, %p47
      %p49 = scmp.ne.s32.totalorder %s38, %s41
      %p50 = scmp.eq.s32.totalorder %s19, 7
      %p51 = por %p49, %p50
      %p52 = scmp.ne.s32.totalorder %s41, %s42
      %p53 = scmp.eq.s32.totalorder %s19, 0
      %p54 = por %p52, %p53
      %p55 = scmp.ne.s32.totalorder %s41, %s42
      %p56 = scmp.eq.s32.totalorder %s20, 7
      %p57 = por %p55, %p56
      %p59 = scmp.ne.s32.totalorder %s42, %s58
      %p60 = scmp.eq.s32.totalorder %s20, 0
      %p61 = por %p59, %p60
      %s62 = ssub.s32 %s22, %s29
      %p63 = scmp.eq.s32.totalorder %s62, 0
      %s65 = sadd.s32 %s64, 1
      %s66 = scalar_select %p63, %s64, %s65
      %p69 = pneg %p63
      %p70 = scmp.eq.s32.totalorder %s14, 7
      %p71 = por %p69, %p70
      %p72 = scmp.ne.s32.totalorder %s64, %s67
      %p73 = scmp.eq.s32.totalorder %s14, 0
      %p74 = por %p72, %p73
      %p75 = scmp.ne.s32.totalorder %s64, %s67
      %p76 = scmp.eq.s32.totalorder %s19, 7
      %p77 = por %p75, %p76
      %p78 = scmp.ne.s32.totalorder %s67, %s68
      %p79 = scmp.eq.s32.totalorder %s19, 0
      %p80 = por %p78, %p79
      %p81 = scmp.ne.s32.totalorder %s67, %s68
      %p82 = scmp.eq.s32.totalorder %s20, 7
      %p83 = por %p81, %p82
      %p85 = scmp.ne.s32.totalorder %s68, %s84
      %p86 = scmp.eq.s32.totalorder %s20, 0
      %p87 = por %p85, %p86
      %s89 = sadd.s32 %s88, 1
      %p92 = scmp.eq.s32.totalorder %s14, 7
      %p93 = scmp.ne.s32.totalorder %s88, %s90
      %p94 = scmp.eq.s32.totalorder %s14, 0
      %p95 = por %p93, %p94
      %p96 = scmp.ne.s32.totalorder %s88, %s90
      %p97 = scmp.eq.s32.totalorder %s19, 7
      %p98 = por %p96, %p97
      %p99 = scmp.ne.s32.totalorder %s90, %s91
      %p100 = scmp.eq.s32.totalorder %s19, 0
      %p101 = por %p99, %p100
      %p102 = scmp.ne.s32.totalorder %s90, %s91
      %p103 = scmp.eq.s32.totalorder %s20, 7
      %p104 = por %p102, %p103
      %p106 = scmp.ne.s32.totalorder %s91, %s105
      %p107 = scmp.eq.s32.totalorder %s20, 0
      %p108 = por %p106, %p107
      %s110 = sadd.s32 %s109, 1
      %p113 = scmp.eq.s32.totalorder %s14, 7
      %p114 = scmp.ne.s32.totalorder %s109, %s111
      %p115 = scmp.eq.s32.totalorder %s14, 0
      %p116 = por %p114, %p115
      %p117 = scmp.ne.s32.totalorder %s109, %s111
      %p118 = scmp.eq.s32.totalorder %s19, 7
      %p119 = por %p117, %p118
      %p120 = scmp.ne.s32.totalorder %s111, %s112
      %p121 = scmp.eq.s32.totalorder %s19, 0
      %p122 = por %p120, %p121
      %p123 = scmp.ne.s32.totalorder %s111, %s112
      %p124 = scmp.eq.s32.totalorder %s20, 7
      %p125 = por %p123, %p124
      %p127 = scmp.ne.s32.totalorder %s112, %s126
      %p128 = scmp.eq.s32.totalorder %s20, 0
      %p129 = por %p127, %p128
      %s131 = sadd.s32 %s130, 1
      %p134 = scmp.eq.s32.totalorder %s14, 7
      %p135 = scmp.ne.s32.totalorder %s130, %s132
      %p136 = scmp.eq.s32.totalorder %s14, 0
      %p137 = por %p135, %p136
      %p138 = scmp.ne.s32.totalorder %s130, %s132
      %p139 = scmp.eq.s32.totalorder %s19, 7
      %p140 = por %p138, %p139
      %p141 = scmp.ne.s32.totalorder %s132, %s133
      %p142 = scmp.eq.s32.totalorder %s19, 0
      %p143 = por %p141, %p142
      %p144 = scmp.ne.s32.totalorder %s132, %s133
      %p145 = scmp.eq.s32.totalorder %s20, 7
      %p146 = por %p144, %p145
      %p148 = scmp.ne.s32.totalorder %s133, %s147
      %p149 = scmp.eq.s32.totalorder %s20, 0
      %p150 = por %p148, %p149
      %s152 = sadd.s32 %s151, 1
      %p155 = scmp.eq.s32.totalorder %s14, 7
      %p156 = scmp.ne.s32.totalorder %s151, %s153
      %p157 = scmp.eq.s32.totalorder %s14, 0
      %p158 = por %p156, %p157
      %p159 = scmp.ne.s32.totalorder %s151, %s153
      %p160 = scmp.eq.s32.totalorder %s19, 7
      %p161 = por %p159, %p160
      %p162 = scmp.ne.s32.totalorder %s153, %s154
      %p163 = scmp.eq.s32.totalorder %s19, 0
      %p164 = por %p162, %p163
      %p165 = scmp.ne.s32.totalorder %s153, %s154
      %p166 = scmp.eq.s32.totalorder %s20, 7
      %p167 = por %p165, %p166
      %p169 = scmp.ne.s32.totalorder %s154, %s168
      %p170 = scmp.eq.s32.totalorder %s20, 0
      %p171 = por %p169, %p170
      %s172 = ssub.s32 %s21, %s33
      %p173 = scmp.eq.s32.totalorder %s172, 0
      %s175 = sadd.s32 %s174, 1
      %s176 = scalar_select %p173, %s174, %s175
      %p179 = pneg %p173
      %p180 = scmp.eq.s32.totalorder %s14, 7
      %p181 = por %p179, %p180
      %p182 = scmp.ne.s32.totalorder %s174, %s177
      %p183 = scmp.eq.s32.totalorder %s14, 0
      %p184 = por %p182, %p183
      %p185 = scmp.ne.s32.totalorder %s174, %s177
      %p186 = scmp.eq.s32.totalorder %s19, 7
      %p187 = por %p185, %p186
      %p188 = scmp.ne.s32.totalorder %s177, %s178
      %p189 = scmp.eq.s32.totalorder %s19, 0
      %p190 = por %p188, %p189
      %p191 = scmp.ne.s32.totalorder %s177, %s178
      %p192 = scmp.eq.s32.totalorder %s20, 7
      %p193 = por %p191, %p192
      %p195 = scmp.ne.s32.totalorder %s178, %s194
      %p196 = scmp.eq.s32.totalorder %s20, 0
      %p197 = por %p195, %p196
      %s198 = ssub.s32 %s21, %s33
      %p199 = scmp.eq.s32.totalorder %s198, 0
      %s201 = sadd.s32 %s200, 1
      %s202 = scalar_select %p199, %s200, %s201
      %p205 = pneg %p199
      %p206 = scmp.eq.s32.totalorder %s14, 7
      %p207 = por %p205, %p206
      %p208 = scmp.ne.s32.totalorder %s200, %s203
      %p209 = scmp.eq.s32.totalorder %s14, 0
      %p210 = por %p208, %p209
      %p211 = scmp.ne.s32.totalorder %s200, %s203
      %p212 = scmp.eq.s32.totalorder %s19, 7
      %p213 = por %p211, %p212
      %p214 = scmp.ne.s32.totalorder %s203, %s204
      %p215 = scmp.eq.s32.totalorder %s19, 0
      %p216 = por %p214, %p215
      %p217 = scmp.ne.s32.totalorder %s203, %s204
      %p218 = scmp.eq.s32.totalorder %s20, 7
      %p219 = por %p217, %p218
      %p221 = scmp.ne.s32.totalorder %s204, %s220
      %p222 = scmp.eq.s32.totalorder %s20, 0
      %p223 = por %p221, %p222
      %p224 = scmp.le.s32.totalorder 1, %s14
      %p225 = scmp.lt.s32.totalorder %s14, 9
      %p226 = pnand %p224, %p225
      %p227 = pneg %p226
      // Predicated region
      $region9: #{_gcn_forward_impl.5} parent=5 // pred_check
        _
      $region10: #{_gcn_forward_impl.5} parent=5 // pred_check_branch
        %229 = sbr.rel (%p226) target = $region12
      $region11: #{_gcn_forward_impl.5} parent=5 // pred_region
        %s230 = ssub.s32 %s14, 1
        // Predicated region
        $region13: #{_gcn_forward_impl.5} parent=11 // pred_check
          %p231 = pneg %p101
        $region14: #{_gcn_forward_impl.5} parent=11 // pred_check_branch
          %233 = sbr.rel (%p231) target = $region16
        $region15: #{_gcn_forward_impl.5} parent=11 // pred_region
          _
        $region16: #{_gcn_forward_impl.5} parent=11 // pred_fallthru
          _
        // Predicated region
        $region17: #{_gcn_forward_impl.5} parent=11 // pred_check
          %p234 = pneg %p122
        $region18: #{_gcn_forward_impl.5} parent=11 // pred_check_branch
          %236 = sbr.rel (%p234) target = $region20
        $region19: #{_gcn_forward_impl.5} parent=11 // pred_region
          _
        $region20: #{_gcn_forward_impl.5} parent=11 // pred_fallthru
          _
        // Predicated region
        $region21: #{_gcn_forward_impl.5} parent=11 // pred_check
          %p237 = pneg %p143
        $region22: #{_gcn_forward_impl.5} parent=11 // pred_check_branch
          %239 = sbr.rel (%p237) target = $region24
        $region23: #{_gcn_forward_impl.5} parent=11 // pred_region
          _
        $region24: #{_gcn_forward_impl.5} parent=11 // pred_fallthru
          _
        // Predicated region
        $region25: #{_gcn_forward_impl.5} parent=11 // pred_check
          %p240 = pneg %p164
        $region26: #{_gcn_forward_impl.5} parent=11 // pred_check_branch
          %242 = sbr.rel (%p240) target = $region28
        $region27: #{_gcn_forward_impl.5} parent=11 // pred_region
          _
        $region28: #{_gcn_forward_impl.5} parent=11 // pred_fallthru
          _
      $region12: #{_gcn_forward_impl.5} parent=5 // pred_fallthru
        _
      %p243 = scmp.lt.s32.totalorder %s14, 8
      // Predicated region
      $region29: #{_gcn_forward_impl.5} parent=5 // pred_check
        %p244 = pneg %p243
      $region30: #{_gcn_forward_impl.5} parent=5 // pred_check_branch
        %246 = sbr.rel (%p244) target = $region32
      $region31: #{_gcn_forward_impl.5} parent=5 // pred_region
        // Predicated region
        $region33: #{_gcn_forward_impl.5} parent=31 // pred_check
          %p247 = pneg %p48
        $region34: #{_gcn_forward_impl.5} parent=31 // pred_check_branch
          %249 = sbr.rel (%p247) target = $region36
        $region35: #{_gcn_forward_impl.5} parent=31 // pred_region
          %s250 = sand.u32 %s38, 1
          %s251 = sand.u32 %s38, 1
          %s252 = smul.addr %s251, 32
          %s253 = scalar_lea.vmem [#allocation3], %s252
          %s254 = smul.u32 8, %s21
          %s255 = smul.addr %s254, 2
          %s256 = sadd.s32 %s22, %s255
          %s257 = smul.addr %s256, 4
          %s258 = scalar_lea.vmem %s0, %s257
          // Predicated region
          $region37: #{_gcn_forward_impl.5} parent=35 // pred_check
            _
          $region38: #{_gcn_forward_impl.5} parent=35 // pred_check_branch
            %260 = sbr.rel (0) target = $region40
          $region39: #{_gcn_forward_impl.5} parent=35 // pred_region
            // Predicated region
            $region41: #{_gcn_forward_impl.5} parent=39 // pred_check
              _
            $region42: #{_gcn_forward_impl.5} parent=39 // pred_check_branch
              %262 = sbr.rel target = $region44
            $region43: #{_gcn_forward_impl.5} parent=39 // pred_region
              // Predicated region
              $region56: #{_gcn_forward_impl.5} parent=43 // pred_check
                _
              $region57: #{_gcn_forward_impl.5} parent=43 // pred_check_branch
                %292 = sbr.rel (0) target = $region59
              $region58: #{_gcn_forward_impl.5} parent=43 // pred_region
                loop: start=0, step=1, limit=1
                $region60: #{_gcn_forward_impl.5} parent=58 // loop_pre_header
                  _
                $region61: #{_gcn_forward_impl.5} parent=58 // loop_header
                  %s294 = sphi 0, %s298
                  %p295 = scmp.ge.s32.totalorder %s294, 1
                  %s299 = sphi %s258, %s258
                  %s300 = sphi %s253, %s253
                $region62: #{_gcn_forward_impl.5} parent=58 // loop_header_branch
                  %297 = sbr.rel (%p295) target = $region66
                $region63: #{_gcn_forward_impl.5} parent=58 // loop_body
                  _
                $region64: #{_gcn_forward_impl.5} parent=58 // loop_footer
                  %s298 = sadd.s32 1, %s294
                $region65: #{_gcn_forward_impl.5} parent=58 // loop_footer_branch
                  %293 = sbr.rel target = $region61
                $region66: #{_gcn_forward_impl.5} parent=58 // loop_exit
                  _
                %s302 = ssub.s32 16, 1
                loop: start=0, step=1, limit=1
                $region67: #{_gcn_forward_impl.5} parent=58 // loop_pre_header
                  _
                $region68: #{_gcn_forward_impl.5} parent=58 // loop_header
                  %s304 = sphi 0, %s308
                  %p305 = scmp.ge.s32.totalorder %s304, 1
                  %s309 = sphi %s258, %s258
                  %s310 = sphi %s253, %s253
                $region69: #{_gcn_forward_impl.5} parent=58 // loop_header_branch
                  %307 = sbr.rel (%p305) target = $region73
                $region70: #{_gcn_forward_impl.5} parent=58 // loop_body
                  %v311 = vld [vmem:[%s309] sm:%s302]
                  %312 = vst [vmem:[%s310] sm:%s302] %v311
                  %v313 = vld [vmem:[%s309 + $0x8] sm:%s302]
                  %314 = vst [vmem:[%s310 + $0x4] sm:%s302] %v313
                  %v315 = vld [vmem:[%s309 + $0x10] sm:%s302]
                  %316 = vst [vmem:[%s310 + $0x8] sm:%s302] %v315
                  %v317 = vld [vmem:[%s309 + $0x18] sm:%s302]
                  %318 = vst [vmem:[%s310 + $0xc] sm:%s302] %v317
                  %v319 = vld [vmem:[%s309 + $0x20] sm:%s302]
                  %320 = vst [vmem:[%s310 + $0x10] sm:%s302] %v319
                  %v321 = vld [vmem:[%s309 + $0x28] sm:%s302]
                  %322 = vst [vmem:[%s310 + $0x14] sm:%s302] %v321
                  %v323 = vld [vmem:[%s309 + $0x30] sm:%s302]
                  %324 = vst [vmem:[%s310 + $0x18] sm:%s302] %v323
                  %v325 = vld [vmem:[%s309 + $0x38] sm:%s302]
                  %326 = vst [vmem:[%s310 + $0x1c] sm:%s302] %v325
                $region71: #{_gcn_forward_impl.5} parent=58 // loop_footer
                  %s308 = sadd.s32 1, %s304
                $region72: #{_gcn_forward_impl.5} parent=58 // loop_footer_branch
                  %303 = sbr.rel target = $region68
                $region73: #{_gcn_forward_impl.5} parent=58 // loop_exit
                  _
              $region59: #{_gcn_forward_impl.5} parent=43 // pred_fallthru
                _
            $region44: #{_gcn_forward_impl.5} parent=39 // pred_fallthru
              _
            // Predicated region
            $region45: #{_gcn_forward_impl.5} parent=39 // pred_check
              _
            $region46: #{_gcn_forward_impl.5} parent=39 // pred_check_branch
              %264 = sbr.rel (0) target = $region48
            $region47: #{_gcn_forward_impl.5} parent=39 // pred_region
              %s266 = ssub.s32 16, 1
              loop: start=0, step=1, limit=1
              $region49: #{_gcn_forward_impl.5} parent=47 // loop_pre_header
                _
              $region50: #{_gcn_forward_impl.5} parent=47 // loop_header
                %s268 = sphi 0, %s272
                %p269 = scmp.ge.s32.totalorder %s268, 1
                %s273 = sphi %s258, %s258
                %s274 = sphi %s253, %s253
              $region51: #{_gcn_forward_impl.5} parent=47 // loop_header_branch
                %271 = sbr.rel (%p269) target = $region55
              $region52: #{_gcn_forward_impl.5} parent=47 // loop_body
                %v275 = vld [vmem:[%s273] sm:%s266]
                %276 = vst [vmem:[%s274] sm:%s266] %v275
                %v277 = vld [vmem:[%s273 + $0x8] sm:%s266]
                %278 = vst [vmem:[%s274 + $0x4] sm:%s266] %v277
                %v279 = vld [vmem:[%s273 + $0x10] sm:%s266]
                %280 = vst [vmem:[%s274 + $0x8] sm:%s266] %v279
                %v281 = vld [vmem:[%s273 + $0x18] sm:%s266]
                %282 = vst [vmem:[%s274 + $0xc] sm:%s266] %v281
                %v283 = vld [vmem:[%s273 + $0x20] sm:%s266]
                %284 = vst [vmem:[%s274 + $0x10] sm:%s266] %v283
                %v285 = vld [vmem:[%s273 + $0x28] sm:%s266]
                %286 = vst [vmem:[%s274 + $0x14] sm:%s266] %v285
                %v287 = vld [vmem:[%s273 + $0x30] sm:%s266]
                %288 = vst [vmem:[%s274 + $0x18] sm:%s266] %v287
                %v289 = vld [vmem:[%s273 + $0x38] sm:%s266]
                %290 = vst [vmem:[%s274 + $0x1c] sm:%s266] %v289
              $region53: #{_gcn_forward_impl.5} parent=47 // loop_footer
                %s272 = sadd.s32 1, %s268
              $region54: #{_gcn_forward_impl.5} parent=47 // loop_footer_branch
                %267 = sbr.rel target = $region50
              $region55: #{_gcn_forward_impl.5} parent=47 // loop_exit
                _
            $region48: #{_gcn_forward_impl.5} parent=39 // pred_fallthru
              _
          $region40: #{_gcn_forward_impl.5} parent=35 // pred_fallthru
            _
          %327 = vnop
        $region36: #{_gcn_forward_impl.5} parent=31 // pred_fallthru
          _
        // Predicated region
        $region74: #{_gcn_forward_impl.5} parent=31 // pred_check
          %p328 = pneg %p74
        $region75: #{_gcn_forward_impl.5} parent=31 // pred_check_branch
          %330 = sbr.rel (%p328) target = $region77
        $region76: #{_gcn_forward_impl.5} parent=31 // pred_region
          %s331 = smul.u32 16, %s22
          %p332 = scmp.lt.s32.totalorder %s331, 31
          %s333 = scalar_select %p332, %s331, 31
          %s334 = smul.addr %s333, 4
          %s335 = scalar_lea.vmem %s1, %s334
          %s336 = smul.u32 16, %s22
        $region77: #{_gcn_forward_impl.5} parent=31 // pred_fallthru
          _
      $region32: #{_gcn_forward_impl.5} parent=5 // pred_fallthru
        _
      %p337 = scmp.le.s32.totalorder 1, %s14
      %p338 = scmp.lt.s32.totalorder %s14, 9
      %p339 = pnand %p337, %p338
      %p340 = pneg %p339
      // Predicated region
      $region78: #{_gcn_forward_impl.5} parent=5 // pred_check
        _
      $region79: #{_gcn_forward_impl.5} parent=5 // pred_check_branch
        %342 = sbr.rel (%p339) target = $region81
      $region80: #{_gcn_forward_impl.5} parent=5 // pred_region
        %s343 = ssub.s32 %s14, 1
        %s344 = sand.u32 %s41, 1
        %s345 = sand.u32 %s41, 1
        %s346 = smul.addr %s345, 32
        %s347 = scalar_lea.vmem [#allocation3], %s346
        // Predicated region
        $region82: #{_gcn_forward_impl.5} parent=80 // pred_check
          %p348 = pneg %p54
        $region83: #{_gcn_forward_impl.5} parent=80 // pred_check_branch
          %350 = sbr.rel (%p348) target = $region85
        $region84: #{_gcn_forward_impl.5} parent=80 // pred_region
          _
        $region85: #{_gcn_forward_impl.5} parent=80 // pred_fallthru
          _
        %s351 = sand.u32 %s41, 1
        %s352 = sand.u32 %s41, 1
        %s353 = smul.addr %s352, 32
        %s354 = scalar_lea.vmem [#allocation3], %s353
        %p355 = pneg %p54
        %p356 = pneg %p51
        %s357 = smul.u32 16, %s24
        %p358 = scmp.lt.s32.totalorder %s357, 31
        %s359 = scalar_select %p358, %s357, 31
        %s360 = smul.addr %s359, 4
        %s361 = scalar_lea.vmem %s1, %s360
        %p362 = pneg %p80
        %p363 = pneg %p77
        %p364 = pneg %p101
        %p365 = pneg %p98
        %p366 = pneg %p122
        %p367 = pneg %p119
        %p368 = pneg %p143
        %p369 = pneg %p140
        %p370 = pneg %p164
        %p371 = pneg %p161
        %p372 = pneg %p190
        %p373 = pneg %p187
        %s374 = smul.u32 8, %s23
        %p375 = scmp.lt.s32.totalorder %s374, 31
        %s376 = scalar_select %p375, %s374, 31
        %s377 = smul.addr %s376, 8
        %s378 = scalar_lea.vmem %s6, %s377
        %p379 = pneg %p216
        %p380 = pneg %p213
        %s381 = smul.u32 8, %s23
        %p382 = scmp.lt.s32.totalorder %s381, 31
        %s383 = scalar_select %p382, %s381, 31
        %s384 = smul.addr %s383, 8
        %s385 = scalar_lea.vmem %s7, %s384
        %s386 = smul.u32 8, %s23
        %s387 = smul.u32 16, %s24
        %p388 = scmp.lt.s32.totalorder %s387, 31
        %s389 = scalar_select %p388, %s387, 31
        %s390 = smul.addr %s389, 4
        %s391 = scalar_lea.vmem %s1, %s390
        %s392 = smul.u32 16, %s24
        %s393 = smul.u32 8, %s23
        %p394 = scmp.lt.s32.totalorder %s393, 31
        %s395 = scalar_select %p394, %s393, 31
        %s396 = smul.addr %s395, 8
        %s397 = scalar_lea.vmem %s6, %s396
        %s398 = smul.u32 8, %s23
        %s399 = smul.u32 8, %s23
        %p400 = scmp.lt.s32.totalorder %s399, 31
        %s401 = scalar_select %p400, %s399, 31
        %s402 = smul.addr %s401, 8
        %s403 = scalar_lea.vmem %s7, %s402
        %s404 = smul.u32 8, %s23
        %p405 = scmp.eq.s32.totalorder %s24, 0
        // Predicated region
        $region86: #{_gcn_forward_impl.5} parent=80 // pred_check
          %p406 = pneg %p405
        $region87: #{_gcn_forward_impl.5} parent=80 // pred_check_branch
          %408 = sbr.rel (%p406) target = $region89
        $region88: #{_gcn_forward_impl.5} parent=80 // pred_region
          %409 = vst [vmem:[#allocation2] sm:$0xff] 0.0
          %410 = vst [vmem:[#allocation2 + $0x8] sm:$0xff] 0.0
          %411 = vst [vmem:[#allocation2 + $0x10] sm:$0xff] 0.0
          %412 = vst [vmem:[#allocation2 + $0x18] sm:$0xff] 0.0
          %413 = vst [vmem:[#allocation2 + $0x20] sm:$0xff] 0.0
          %414 = vst [vmem:[#allocation2 + $0x28] sm:$0xff] 0.0
          %415 = vst [vmem:[#allocation2 + $0x30] sm:$0xff] 0.0
          %416 = vst [vmem:[#allocation2 + $0x38] sm:$0xff] 0.0
        $region89: #{_gcn_forward_impl.5} parent=80 // pred_fallthru
          _
        %v417 = vld [vmem:[#allocation2] sm:$0xff]
        %v418 = vld [vmem:[#allocation2 + $0x8] sm:$0xff]
        %v419 = vld [vmem:[#allocation2 + $0x10] sm:$0xff]
        %v420 = vld [vmem:[#allocation2 + $0x18] sm:$0xff]
        %v421 = vld [vmem:[#allocation2 + $0x20] sm:$0xff]
        %v422 = vld [vmem:[#allocation2 + $0x28] sm:$0xff]
        %v423 = vld [vmem:[#allocation2 + $0x30] sm:$0xff]
        %v424 = vld [vmem:[#allocation2 + $0x38] sm:$0xff]
        %v425 = vld [vmem:[%s347] sm:$0xf]
        %v426 = vld [vmem:[%s347 + $0x4] sm:$0xf]
        %v427 = vld [vmem:[%s347 + $0x8] sm:$0xf]
        %v428 = vld [vmem:[%s347 + $0xc] sm:$0xf]
        %v429 = vld [vmem:[%s347 + $0x10] sm:$0xf]
        %v430 = vld [vmem:[%s347 + $0x14] sm:$0xf]
        %v431 = vld [vmem:[%s347 + $0x18] sm:$0xf]
        %v432 = vld [vmem:[%s347 + $0x1c] sm:$0xf]
        %v433 = vld [vmem:[%s391] sm:$0xf]
        %v434 = vld [vmem:[%s391 + $0x4] sm:$0xf]
        %v435 = vld [vmem:[%s391 + $0x8] sm:$0xf]
        %v436 = vld [vmem:[%s391 + $0xc] sm:$0xf]
        %v437 = vld [vmem:[%s391 + $0x10] sm:$0xf]
        %v438 = vld [vmem:[%s391 + $0x14] sm:$0xf]
        %v439 = vld [vmem:[%s391 + $0x18] sm:$0xf]
        %v440 = vld [vmem:[%s391 + $0x1c] sm:$0xf]
        %v441 = vld [vmem:[%s391 + $0x20] sm:$0xf]
        %v442 = vld [vmem:[%s391 + $0x24] sm:$0xf]
        %v443 = vld [vmem:[%s391 + $0x28] sm:$0xf]
        %v444 = vld [vmem:[%s391 + $0x2c] sm:$0xf]
        %v445 = vld [vmem:[%s391 + $0x30] sm:$0xf]
        %v446 = vld [vmem:[%s391 + $0x34] sm:$0xf]
        %v447 = vld [vmem:[%s391 + $0x38] sm:$0xf]
        %v448 = vld [vmem:[%s391 + $0x3c] sm:$0xf]
        %v457 = vunpack.c.l.b16 %v425
        %v458 = vunpack.c.l.b16 %v426
        %v459 = vunpack.c.l.b16 %v427
        %v460 = vunpack.c.l.b16 %v428
        %v461 = vunpack.c.l.b16 %v429
        %v462 = vunpack.c.l.b16 %v430
        %v463 = vunpack.c.l.b16 %v431
        %v464 = vunpack.c.l.b16 %v432
        %v465 = vpack.c.b16 %v458, %v457
        %v466 = vpack.c.b16 %v460, %v459
        %v467 = vpack.c.b16 %v462, %v461
        %v468 = vpack.c.b16 %v464, %v463
        %v489 = vunpack.c.l.b16 %v433
        %v490 = vunpack.c.l.b16 %v434
        %v491 = vunpack.c.l.b16 %v435
        %v492 = vunpack.c.l.b16 %v436
        %v493 = vunpack.c.l.b16 %v437
        %v494 = vunpack.c.l.b16 %v438
        %v495 = vunpack.c.l.b16 %v439
        %v496 = vunpack.c.l.b16 %v440
        %v497 = vunpack.c.l.b16 %v441
        %v498 = vunpack.c.l.b16 %v442
        %v499 = vunpack.c.l.b16 %v443
        %v500 = vunpack.c.l.b16 %v444
        %v501 = vunpack.c.l.b16 %v445
        %v502 = vunpack.c.l.b16 %v446
        %v503 = vunpack.c.l.b16 %v447
        %v504 = vunpack.c.l.b16 %v448
        %v505 = vpack.c.b16 %v490, %v489
        %v506 = vpack.c.b16 %v492, %v491
        %v507 = vpack.c.b16 %v494, %v493
        %v508 = vpack.c.b16 %v496, %v495
        %v509 = vpack.c.b16 %v498, %v497
        %v510 = vpack.c.b16 %v500, %v499
        %v511 = vpack.c.b16 %v502, %v501
        %v512 = vpack.c.b16 %v504, %v503
        %521 = vmatpush.bf16.msra.mxu0 %v512
        %522 = vmatpush.bf16.msra.mxu0 %v511
        %523 = vmatpush.bf16.msra.mxu0 %v510
        %524 = vmatpush.bf16.msra.mxu0 %v509
        %525 = vmatpush.bf16.msra.mxu0 %v508
        %526 = vmatpush.bf16.msra.mxu0 %v507
        %527 = vmatpush.bf16.msra.mxu0 %v506
        %528 = vmatpush.bf16.msra.mxu0 %v505
        %529 = vmatmul.bf16.gmra.mxu0 %v465
        %v530 = vpop.f32.mrf.mxu0
        %v531 = vadd.f32 0.0, %v530
        %v532 = vpop.f32.mrf.mxu0
        %v533 = vadd.f32 0.0, %v532
        %534 = vmatmul.bf16.gmra.mxu0 %v466
        %v535 = vpop.f32.mrf.mxu0
        %v536 = vadd.f32 0.0, %v535
        %v537 = vpop.f32.mrf.mxu0
        %v538 = vadd.f32 0.0, %v537
        %539 = vmatmul.bf16.gmra.mxu0 %v467
        %v540 = vpop.f32.mrf.mxu0
        %v541 = vadd.f32 0.0, %v540
        %v542 = vpop.f32.mrf.mxu0
        %v543 = vadd.f32 0.0, %v542
        %544 = vmatmul.bf16.gmra.mxu0 %v468
        %v545 = vpop.f32.mrf.mxu0
        %v546 = vadd.f32 0.0, %v545
        %v547 = vpop.f32.mrf.mxu0
        %v548 = vadd.f32 0.0, %v547
        %549 = vdwg.mxu0
        %v550 = vadd.f32 %v417, %v531
        %v551 = vadd.f32 %v418, %v533
        %v552 = vadd.f32 %v419, %v536
        %v553 = vadd.f32 %v420, %v538
        %v554 = vadd.f32 %v421, %v541
        %v555 = vadd.f32 %v422, %v543
        %v556 = vadd.f32 %v423, %v546
        %v557 = vadd.f32 %v424, %v548
        %558 = vst [vmem:[#allocation2] sm:$0xff] %v550
        %559 = vst [vmem:[#allocation2 + $0x8] sm:$0xff] %v551
        %560 = vst [vmem:[#allocation2 + $0x10] sm:$0xff] %v552
        %561 = vst [vmem:[#allocation2 + $0x18] sm:$0xff] %v553
        %562 = vst [vmem:[#allocation2 + $0x20] sm:$0xff] %v554
        %563 = vst [vmem:[#allocation2 + $0x28] sm:$0xff] %v555
        %564 = vst [vmem:[#allocation2 + $0x30] sm:$0xff] %v556
        %565 = vst [vmem:[#allocation2 + $0x38] sm:$0xff] %v557
        %p566 = scmp.eq.s32.totalorder %s24, 1
        // Predicated region
        $region90: #{_gcn_forward_impl.5} parent=80 // pred_check
          %p567 = pneg %p566
        $region91: #{_gcn_forward_impl.5} parent=80 // pred_check_branch
          %569 = sbr.rel (%p567) target = $region93
        $region92: #{_gcn_forward_impl.5} parent=80 // pred_region
          %v570 = vld [vmem:[#allocation2] sm:$0xff]
          %v571 = vld [vmem:[#allocation2 + $0x8] sm:$0xff]
          %v572 = vld [vmem:[#allocation2 + $0x10] sm:$0xff]
          %v573 = vld [vmem:[#allocation2 + $0x18] sm:$0xff]
          %v574 = vld [vmem:[#allocation2 + $0x20] sm:$0xff]
          %v575 = vld [vmem:[#allocation2 + $0x28] sm:$0xff]
          %v576 = vld [vmem:[#allocation2 + $0x30] sm:$0xff]
          %v577 = vld [vmem:[#allocation2 + $0x38] sm:$0xff]
          %v578 = vld [vmem:[%s2] sm:$0xff]
          %v579 = vld [vmem:[%s2 + $0x8] sm:$0xff]
          %v580 = vld [vmem:[%s2 + $0x10] sm:$0xff]
          %v581 = vld [vmem:[%s2 + $0x18] sm:$0xff]
          %v582 = vld [vmem:[%s2 + $0x20] sm:$0xff]
          %v583 = vld [vmem:[%s2 + $0x28] sm:$0xff]
          %v584 = vld [vmem:[%s2 + $0x30] sm:$0xff]
          %v585 = vld [vmem:[%s2 + $0x38] sm:$0xff]
          %v586 = vld [vmem:[%s2 + $0x40] sm:$0xff]
          %v587 = vld [vmem:[%s2 + $0x48] sm:$0xff]
          %v588 = vld [vmem:[%s2 + $0x50] sm:$0xff]
          %v589 = vld [vmem:[%s2 + $0x58] sm:$0xff]
          %v590 = vld [vmem:[%s2 + $0x60] sm:$0xff]
          %v591 = vld [vmem:[%s2 + $0x68] sm:$0xff]
          %v592 = vld [vmem:[%s2 + $0x70] sm:$0xff]
          %v593 = vld [vmem:[%s2 + $0x78] sm:$0xff]
          %v594 = vld [vmem:[%s3] sm:$0x1]
          %v596 = vperm.slane %v594, 0
          %598 = vmatpush.msra.mxu0 %v593
          %599 = vmatpush.msra.mxu0 %v592
          %600 = vmatpush.msra.mxu0 %v591
          %601 = vmatpush.msra.mxu0 %v590
          %602 = vmatpush.msra.mxu0 %v589
          %603 = vmatpush.msra.mxu0 %v588
          %604 = vmatpush.msra.mxu0 %v587
          %605 = vmatpush.msra.mxu0 %v586
          %606 = vmatpush.msra.mxu0 %v585
          %607 = vmatpush.msra.mxu0 %v584
          %608 = vmatpush.msra.mxu0 %v583
          %609 = vmatpush.msra.mxu0 %v582
          %610 = vmatpush.msra.mxu0 %v581
          %611 = vmatpush.msra.mxu0 %v580
          %612 = vmatpush.msra.mxu0 %v579
          %613 = vmatpush.msra.mxu0 %v578
          %614 = vmatmul.f32.gmra.mxu0 %v570
          %v615 = vpop.f32.mrf.mxu0
          %v616 = vadd.f32 %v596, %v615
          %617 = vmatmul.f32.gmra.mxu0 %v571
          %v618 = vpop.f32.mrf.mxu0
          %v619 = vadd.f32 %v596, %v618
          %620 = vmatmul.f32.gmra.mxu0 %v572
          %v621 = vpop.f32.mrf.mxu0
          %v622 = vadd.f32 %v596, %v621
          %623 = vmatmul.f32.gmra.mxu0 %v573
          %v624 = vpop.f32.mrf.mxu0
          %v625 = vadd.f32 %v596, %v624
          %626 = vmatmul.f32.gmra.mxu0 %v574
          %v627 = vpop.f32.mrf.mxu0
          %v628 = vadd.f32 %v596, %v627
          %629 = vmatmul.f32.gmra.mxu0 %v575
          %v630 = vpop.f32.mrf.mxu0
          %v631 = vadd.f32 %v596, %v630
          %632 = vmatmul.f32.gmra.mxu0 %v576
          %v633 = vpop.f32.mrf.mxu0
          %v634 = vadd.f32 %v596, %v633
          %635 = vmatmul.f32.gmra.mxu0 %v577
          %v636 = vpop.f32.mrf.mxu0
          %v637 = vadd.f32 %v596, %v636
          %638 = vdwg.mxu0
          %v639 = vtanh.pop %v616
          %v640 = vtanh.pop %v619
          %v641 = vtanh.pop %v622
          %v642 = vtanh.pop %v625
          %v643 = vtanh.pop %v628
          %v644 = vtanh.pop %v631
          %v645 = vtanh.pop %v634
          %v646 = vtanh.pop %v637
          %647 = vst [vmem:[%s403] sm:$0xff] %v639
          %648 = vst [vmem:[%s403 + $0x8] sm:$0xff] %v640
          %649 = vst [vmem:[%s403 + $0x10] sm:$0xff] %v641
          %650 = vst [vmem:[%s403 + $0x18] sm:$0xff] %v642
          %651 = vst [vmem:[%s403 + $0x20] sm:$0xff] %v643
          %652 = vst [vmem:[%s403 + $0x28] sm:$0xff] %v644
          %653 = vst [vmem:[%s403 + $0x30] sm:$0xff] %v645
          %654 = vst [vmem:[%s403 + $0x38] sm:$0xff] %v646
          %v655 = vld [vmem:[%s4] sm:$0xff]
          %v656 = vld [vmem:[%s4 + $0x8] sm:$0xff]
          %v657 = vld [vmem:[%s4 + $0x10] sm:$0xff]
          %v658 = vld [vmem:[%s4 + $0x18] sm:$0xff]
          %v659 = vld [vmem:[%s4 + $0x20] sm:$0xff]
          %v660 = vld [vmem:[%s4 + $0x28] sm:$0xff]
          %v661 = vld [vmem:[%s4 + $0x30] sm:$0xff]
          %v662 = vld [vmem:[%s4 + $0x38] sm:$0xff]
          %v663 = vld [vmem:[%s4 + $0x40] sm:$0xff]
          %v664 = vld [vmem:[%s4 + $0x48] sm:$0xff]
          %v665 = vld [vmem:[%s4 + $0x50] sm:$0xff]
          %v666 = vld [vmem:[%s4 + $0x58] sm:$0xff]
          %v667 = vld [vmem:[%s4 + $0x60] sm:$0xff]
          %v668 = vld [vmem:[%s4 + $0x68] sm:$0xff]
          %v669 = vld [vmem:[%s4 + $0x70] sm:$0xff]
          %v670 = vld [vmem:[%s4 + $0x78] sm:$0xff]
          %v671 = vld [vmem:[%s5] sm:$0x1]
          %v673 = vperm.slane %v671, 0
          %675 = vmatpush.msra.mxu0 %v670
          %676 = vmatpush.msra.mxu0 %v669
          %677 = vmatpush.msra.mxu0 %v668
          %678 = vmatpush.msra.mxu0 %v667
          %679 = vmatpush.msra.mxu0 %v666
          %680 = vmatpush.msra.mxu0 %v665
          %681 = vmatpush.msra.mxu0 %v664
          %682 = vmatpush.msra.mxu0 %v663
          %683 = vmatpush.msra.mxu0 %v662
          %684 = vmatpush.msra.mxu0 %v661
          %685 = vmatpush.msra.mxu0 %v660
          %686 = vmatpush.msra.mxu0 %v659
          %687 = vmatpush.msra.mxu0 %v658
          %688 = vmatpush.msra.mxu0 %v657
          %689 = vmatpush.msra.mxu0 %v656
          %690 = vmatpush.msra.mxu0 %v655
          %691 = vmatmul.f32.gmra.mxu0 %v639
          %v692 = vpop.f32.mrf.mxu0
          %v693 = vadd.f32 %v673, %v692
          %694 = vmatmul.f32.gmra.mxu0 %v640
          %v695 = vpop.f32.mrf.mxu0
          %v696 = vadd.f32 %v673, %v695
          %697 = vmatmul.f32.gmra.mxu0 %v641
          %v698 = vpop.f32.mrf.mxu0
          %v699 = vadd.f32 %v673, %v698
          %700 = vmatmul.f32.gmra.mxu0 %v642
          %v701 = vpop.f32.mrf.mxu0
          %v702 = vadd.f32 %v673, %v701
          %703 = vmatmul.f32.gmra.mxu0 %v643
          %v704 = vpop.f32.mrf.mxu0
          %v705 = vadd.f32 %v673, %v704
          %706 = vmatmul.f32.gmra.mxu0 %v644
          %v707 = vpop.f32.mrf.mxu0
          %v708 = vadd.f32 %v673, %v707
          %709 = vmatmul.f32.gmra.mxu0 %v645
          %v710 = vpop.f32.mrf.mxu0
          %v711 = vadd.f32 %v673, %v710
          %712 = vmatmul.f32.gmra.mxu0 %v646
          %v713 = vpop.f32.mrf.mxu0
          %v714 = vadd.f32 %v673, %v713
          %715 = vdwg.mxu0
          %716 = vst [vmem:[%s397] sm:$0xff] %v693
          %717 = vst [vmem:[%s397 + $0x8] sm:$0xff] %v696
          %718 = vst [vmem:[%s397 + $0x10] sm:$0xff] %v699
          %719 = vst [vmem:[%s397 + $0x18] sm:$0xff] %v702
          %720 = vst [vmem:[%s397 + $0x20] sm:$0xff] %v705
          %721 = vst [vmem:[%s397 + $0x28] sm:$0xff] %v708
          %722 = vst [vmem:[%s397 + $0x30] sm:$0xff] %v711
          %723 = vst [vmem:[%s397 + $0x38] sm:$0xff] %v714
        $region93: #{_gcn_forward_impl.5} parent=80 // pred_fallthru
          _
        %s724 = smul.u32 8, %s23
        %p725 = scmp.lt.s32.totalorder %s724, 31
        %s726 = scalar_select %p725, %s724, 31
        %s727 = smul.addr %s726, 8
        %s728 = scalar_lea.vmem %s6, %s727
        %s729 = smul.u32 8, %s23
        %p730 = scmp.lt.s32.totalorder %s729, 31
        %s731 = scalar_select %p730, %s729, 31
        %s732 = smul.addr %s731, 8
        %s733 = scalar_lea.vmem %s7, %s732
        // Predicated region
        $region94: #{_gcn_forward_impl.5} parent=80 // pred_check
          %p734 = pneg %p187
        $region95: #{_gcn_forward_impl.5} parent=80 // pred_check_branch
          %736 = sbr.rel (%p734) target = $region97
        $region96: #{_gcn_forward_impl.5} parent=80 // pred_region
          %s737 = smul.u32 8, %s23
        $region97: #{_gcn_forward_impl.5} parent=80 // pred_fallthru
          _
        // Predicated region
        $region98: #{_gcn_forward_impl.5} parent=80 // pred_check
          %p738 = pneg %p213
        $region99: #{_gcn_forward_impl.5} parent=80 // pred_check_branch
          %740 = sbr.rel (%p738) target = $region101
        $region100: #{_gcn_forward_impl.5} parent=80 // pred_region
          %s741 = smul.u32 8, %s23
        $region101: #{_gcn_forward_impl.5} parent=80 // pred_fallthru
          _
      $region81: #{_gcn_forward_impl.5} parent=5 // pred_fallthru
        _
      %p742 = scmp.le.s32.totalorder 2, %s14
      // Predicated region
      $region102: #{_gcn_forward_impl.5} parent=5 // pred_check
        %p743 = pneg %p742
      $region103: #{_gcn_forward_impl.5} parent=5 // pred_check_branch
        %745 = sbr.rel (%p743) target = $region105
      $region104: #{_gcn_forward_impl.5} parent=5 // pred_region
        %s746 = ssub.s32 %s14, 2
        // Predicated region
        $region106: #{_gcn_forward_impl.5} parent=104 // pred_check
          %p747 = pneg %p193
        $region107: #{_gcn_forward_impl.5} parent=104 // pred_check_branch
          %749 = sbr.rel (%p747) target = $region109
        $region108: #{_gcn_forward_impl.5} parent=104 // pred_region
          %s750 = smul.u32 8, %s25
          %p751 = scmp.lt.s32.totalorder %s750, 31
          %s752 = scalar_select %p751, %s750, 31
          %s753 = smul.addr %s752, 8
          %s754 = scalar_lea.vmem %s6, %s753
        $region109: #{_gcn_forward_impl.5} parent=104 // pred_fallthru
          _
        // Predicated region
        $region110: #{_gcn_forward_impl.5} parent=104 // pred_check
          %p755 = pneg %p219
        $region111: #{_gcn_forward_impl.5} parent=104 // pred_check_branch
          %757 = sbr.rel (%p755) target = $region113
        $region112: #{_gcn_forward_impl.5} parent=104 // pred_region
          %s758 = smul.u32 8, %s25
          %p759 = scmp.lt.s32.totalorder %s758, 31
          %s760 = scalar_select %p759, %s758, 31
          %s761 = smul.addr %s760, 8
          %s762 = scalar_lea.vmem %s7, %s761
        $region113: #{_gcn_forward_impl.5} parent=104 // pred_fallthru
          _
      $region105: #{_gcn_forward_impl.5} parent=5 // pred_fallthru
        _
    $region6: #{_gcn_forward_impl.5} parent=1 // loop_footer
      %s18 = sadd.s32 1, %s14
    $region7: #{_gcn_forward_impl.5} parent=1 // loop_footer_branch
      %13 = sbr.rel target = $region3
    $region8: #{_gcn_forward_impl.5} parent=1 // loop_exit
      _

// kernel: _gcn_forward_impl.3
$region0: #{_gcn_forward_impl.3}
  #allocation0 [shape = 'u32[]', space=smem, size = 0x4, offset = 0x4, fixed_abs, tag = 'smem constant byte address 0x4 - core index']
  #allocation1 [shape = 'u32[72,128]{1,0:T(1,128)}', space=vmem, size = 0x9000, scoped, tag = 'internal scratch']
  #allocation2 [shape = 'f32[64,128]{1,0:T(8,128)}', space=vmem, size = 0x8000, scoped, tag = 'scratch operand']
  %s0 = inlined_call_operand.vmem [shape: bf16[256,256], index: 0, kind: input, shape index: {}]
  %s1 = inlined_call_operand.vmem [shape: bf16[256,128], index: 1, kind: input, shape index: {}]
  %s2 = inlined_call_operand.vmem [shape: f32[128,128], index: 2, kind: input, shape index: {}]
  %s3 = inlined_call_operand.vmem [shape: f32[1,128], index: 3, kind: input, shape index: {}]
  %s4 = inlined_call_operand.vmem [shape: bf16[256,128], index: 4, kind: output, shape index: {}]
  %s5 = sld [smem:[#allocation0]]
  $region98: #{_gcn_forward_impl.3} parent=0
    _
  %s7 = ssub.s32 1, %s5
  %s8 = scalar_select 0, %s7, %s5
  $region1: #{_gcn_forward_impl.3} parent=0
    #allocation3 [shape = 'u8[32768]{0}', space=vmem, size = 0x8000, scoped, tag = 'input window, operand 0']
    loop: start=0, step=1, limit=10
    $region2: #{_gcn_forward_impl.3} parent=1 // loop_pre_header
      _
    $region3: #{_gcn_forward_impl.3} parent=1 // loop_header
      %s10 = sphi 0, %s14
      %p11 = scmp.ge.s32.totalorder %s10, 10
      %s17 = sphi 0, %s29
      %s18 = sphi 0, %s25
      %s19 = sphi 0, %s17
      %s20 = sphi 0, %s18
      %s21 = sphi 0, %s19
      %s22 = sphi 0, %s20
      %s34 = sphi 0, %s36
      %s37 = sphi 0, %s34
      %s38 = sphi 0, %s37
      %s54 = sphi 0, %s38
      %s60 = sphi 0, %s62
      %s63 = sphi 0, %s60
      %s64 = sphi 0, %s63
      %s80 = sphi 0, %s64
      %s84 = sphi 0, %s84
      %s86 = sphi 0, %s84
      %s87 = sphi 0, %s86
      %s101 = sphi 0, %s87
      %s105 = sphi 0, %s105
      %s107 = sphi 0, %s105
      %s108 = sphi 0, %s107
      %s122 = sphi 0, %s108
      %s128 = sphi 0, %s130
      %s131 = sphi 0, %s128
      %s132 = sphi 0, %s131
      %s148 = sphi 0, %s132
    $region4: #{_gcn_forward_impl.3} parent=1 // loop_header_branch
      %13 = sbr.rel (%p11) target = $region8
    $region5: #{_gcn_forward_impl.3} parent=1 // loop_body
      %s15 = ssub.s32 %s10, 1
      %s16 = ssub.s32 %s10, 2
      %s23 = sadd.s32 1, %s18
      %p24 = scmp.ge.s32.totalorder %s23, 2
      %s25 = scalar_select %p24, 0, %s23
      %s26 = sadd.s32 1, %s17
      %s27 = scalar_select %p24, %s26, %s17
      %p28 = scmp.ge.s32.totalorder %s27, 4
      %s29 = scalar_select %p28, 0, %s27
      %s30 = ssub.s32 %s17, %s29
      %s31 = ssub.s32 %s18, %s25
      %s32 = sor.u32 %s30, %s31
      %p33 = scmp.eq.s32.totalorder %s32, 0
      %s35 = sadd.s32 %s34, 1
      %s36 = scalar_select %p33, %s34, %s35
      %p39 = pneg %p33
      %p40 = scmp.eq.s32.totalorder %s10, 7
      %p41 = por %p39, %p40
      %p42 = scmp.ne.s32.totalorder %s34, %s37
      %p43 = scmp.eq.s32.totalorder %s10, 0
      %p44 = por %p42, %p43
      %p45 = scmp.ne.s32.totalorder %s34, %s37
      %p46 = scmp.eq.s32.totalorder %s15, 7
      %p47 = por %p45, %p46
      %p48 = scmp.ne.s32.totalorder %s37, %s38
      %p49 = scmp.eq.s32.totalorder %s15, 0
      %p50 = por %p48, %p49
      %p51 = scmp.ne.s32.totalorder %s37, %s38
      %p52 = scmp.eq.s32.totalorder %s16, 7
      %p53 = por %p51, %p52
      %p55 = scmp.ne.s32.totalorder %s38, %s54
      %p56 = scmp.eq.s32.totalorder %s16, 0
      %p57 = por %p55, %p56
      %s58 = ssub.s32 %s18, %s25
      %p59 = scmp.eq.s32.totalorder %s58, 0
      %s61 = sadd.s32 %s60, 1
      %s62 = scalar_select %p59, %s60, %s61
      %p65 = pneg %p59
      %p66 = scmp.eq.s32.totalorder %s10, 7
      %p67 = por %p65, %p66
      %p68 = scmp.ne.s32.totalorder %s60, %s63
      %p69 = scmp.eq.s32.totalorder %s10, 0
      %p70 = por %p68, %p69
      %p71 = scmp.ne.s32.totalorder %s60, %s63
      %p72 = scmp.eq.s32.totalorder %s15, 7
      %p73 = por %p71, %p72
      %p74 = scmp.ne.s32.totalorder %s63, %s64
      %p75 = scmp.eq.s32.totalorder %s15, 0
      %p76 = por %p74, %p75
      %p77 = scmp.ne.s32.totalorder %s63, %s64
      %p78 = scmp.eq.s32.totalorder %s16, 7
      %p79 = por %p77, %p78
      %p81 = scmp.ne.s32.totalorder %s64, %s80
      %p82 = scmp.eq.s32.totalorder %s16, 0
      %p83 = por %p81, %p82
      %s85 = sadd.s32 %s84, 1
      %p88 = scmp.eq.s32.totalorder %s10, 7
      %p89 = scmp.ne.s32.totalorder %s84, %s86
      %p90 = scmp.eq.s32.totalorder %s10, 0
      %p91 = por %p89, %p90
      %p92 = scmp.ne.s32.totalorder %s84, %s86
      %p93 = scmp.eq.s32.totalorder %s15, 7
      %p94 = por %p92, %p93
      %p95 = scmp.ne.s32.totalorder %s86, %s87
      %p96 = scmp.eq.s32.totalorder %s15, 0
      %p97 = por %p95, %p96
      %p98 = scmp.ne.s32.totalorder %s86, %s87
      %p99 = scmp.eq.s32.totalorder %s16, 7
      %p100 = por %p98, %p99
      %p102 = scmp.ne.s32.totalorder %s87, %s101
      %p103 = scmp.eq.s32.totalorder %s16, 0
      %p104 = por %p102, %p103
      %s106 = sadd.s32 %s105, 1
      %p109 = scmp.eq.s32.totalorder %s10, 7
      %p110 = scmp.ne.s32.totalorder %s105, %s107
      %p111 = scmp.eq.s32.totalorder %s10, 0
      %p112 = por %p110, %p111
      %p113 = scmp.ne.s32.totalorder %s105, %s107
      %p114 = scmp.eq.s32.totalorder %s15, 7
      %p115 = por %p113, %p114
      %p116 = scmp.ne.s32.totalorder %s107, %s108
      %p117 = scmp.eq.s32.totalorder %s15, 0
      %p118 = por %p116, %p117
      %p119 = scmp.ne.s32.totalorder %s107, %s108
      %p120 = scmp.eq.s32.totalorder %s16, 7
      %p121 = por %p119, %p120
      %p123 = scmp.ne.s32.totalorder %s108, %s122
      %p124 = scmp.eq.s32.totalorder %s16, 0
      %p125 = por %p123, %p124
      %s126 = ssub.s32 %s17, %s29
      %p127 = scmp.eq.s32.totalorder %s126, 0
      %s129 = sadd.s32 %s128, 1
      %s130 = scalar_select %p127, %s128, %s129
      %p133 = pneg %p127
      %p134 = scmp.eq.s32.totalorder %s10, 7
      %p135 = por %p133, %p134
      %p136 = scmp.ne.s32.totalorder %s128, %s131
      %p137 = scmp.eq.s32.totalorder %s10, 0
      %p138 = por %p136, %p137
      %p139 = scmp.ne.s32.totalorder %s128, %s131
      %p140 = scmp.eq.s32.totalorder %s15, 7
      %p141 = por %p139, %p140
      %p142 = scmp.ne.s32.totalorder %s131, %s132
      %p143 = scmp.eq.s32.totalorder %s15, 0
      %p144 = por %p142, %p143
      %p145 = scmp.ne.s32.totalorder %s131, %s132
      %p146 = scmp.eq.s32.totalorder %s16, 7
      %p147 = por %p145, %p146
      %p149 = scmp.ne.s32.totalorder %s132, %s148
      %p150 = scmp.eq.s32.totalorder %s16, 0
      %p151 = por %p149, %p150
      %p152 = scmp.le.s32.totalorder 1, %s10
      %p153 = scmp.lt.s32.totalorder %s10, 9
      %p154 = pnand %p152, %p153
      %p155 = pneg %p154
      // Predicated region
      $region9: #{_gcn_forward_impl.3} parent=5 // pred_check
        _
      $region10: #{_gcn_forward_impl.3} parent=5 // pred_check_branch
        %157 = sbr.rel (%p154) target = $region12
      $region11: #{_gcn_forward_impl.3} parent=5 // pred_region
        %s158 = ssub.s32 %s10, 1
        // Predicated region
        $region13: #{_gcn_forward_impl.3} parent=11 // pred_check
          %p159 = pneg %p97
        $region14: #{_gcn_forward_impl.3} parent=11 // pred_check_branch
          %161 = sbr.rel (%p159) target = $region16
        $region15: #{_gcn_forward_impl.3} parent=11 // pred_region
          _
        $region16: #{_gcn_forward_impl.3} parent=11 // pred_fallthru
          _
        // Predicated region
        $region17: #{_gcn_forward_impl.3} parent=11 // pred_check
          %p162 = pneg %p118
        $region18: #{_gcn_forward_impl.3} parent=11 // pred_check_branch
          %164 = sbr.rel (%p162) target = $region20
        $region19: #{_gcn_forward_impl.3} parent=11 // pred_region
          _
        $region20: #{_gcn_forward_impl.3} parent=11 // pred_fallthru
          _
      $region12: #{_gcn_forward_impl.3} parent=5 // pred_fallthru
        _
      %p165 = scmp.lt.s32.totalorder %s10, 8
      // Predicated region
      $region21: #{_gcn_forward_impl.3} parent=5 // pred_check
        %p166 = pneg %p165
      $region22: #{_gcn_forward_impl.3} parent=5 // pred_check_branch
        %168 = sbr.rel (%p166) target = $region24
      $region23: #{_gcn_forward_impl.3} parent=5 // pred_region
        // Predicated region
        $region25: #{_gcn_forward_impl.3} parent=23 // pred_check
          %p169 = pneg %p44
        $region26: #{_gcn_forward_impl.3} parent=23 // pred_check_branch
          %171 = sbr.rel (%p169) target = $region28
        $region27: #{_gcn_forward_impl.3} parent=23 // pred_region
          %s172 = sand.u32 %s34, 1
          %s173 = sand.u32 %s34, 1
          %s174 = smul.addr %s173, 32
          %s175 = scalar_lea.vmem [#allocation3], %s174
          %s176 = smul.u32 8, %s17
          %s177 = smul.addr %s176, 2
          %s178 = sadd.s32 %s18, %s177
          %s179 = smul.addr %s178, 4
          %s180 = scalar_lea.vmem %s0, %s179
          // Predicated region
          $region29: #{_gcn_forward_impl.3} parent=27 // pred_check
            _
          $region30: #{_gcn_forward_impl.3} parent=27 // pred_check_branch
            %182 = sbr.rel (0) target = $region32
          $region31: #{_gcn_forward_impl.3} parent=27 // pred_region
            // Predicated region
            $region33: #{_gcn_forward_impl.3} parent=31 // pred_check
              _
            $region34: #{_gcn_forward_impl.3} parent=31 // pred_check_branch
              %184 = sbr.rel target = $region36
            $region35: #{_gcn_forward_impl.3} parent=31 // pred_region
              // Predicated region
              $region48: #{_gcn_forward_impl.3} parent=35 // pred_check
                _
              $region49: #{_gcn_forward_impl.3} parent=35 // pred_check_branch
                %214 = sbr.rel (0) target = $region51
              $region50: #{_gcn_forward_impl.3} parent=35 // pred_region
                loop: start=0, step=1, limit=1
                $region52: #{_gcn_forward_impl.3} parent=50 // loop_pre_header
                  _
                $region53: #{_gcn_forward_impl.3} parent=50 // loop_header
                  %s216 = sphi 0, %s220
                  %p217 = scmp.ge.s32.totalorder %s216, 1
                  %s221 = sphi %s180, %s180
                  %s222 = sphi %s175, %s175
                $region54: #{_gcn_forward_impl.3} parent=50 // loop_header_branch
                  %219 = sbr.rel (%p217) target = $region58
                $region55: #{_gcn_forward_impl.3} parent=50 // loop_body
                  _
                $region56: #{_gcn_forward_impl.3} parent=50 // loop_footer
                  %s220 = sadd.s32 1, %s216
                $region57: #{_gcn_forward_impl.3} parent=50 // loop_footer_branch
                  %215 = sbr.rel target = $region53
                $region58: #{_gcn_forward_impl.3} parent=50 // loop_exit
                  _
                %s224 = ssub.s32 16, 1
                loop: start=0, step=1, limit=1
                $region59: #{_gcn_forward_impl.3} parent=50 // loop_pre_header
                  _
                $region60: #{_gcn_forward_impl.3} parent=50 // loop_header
                  %s226 = sphi 0, %s230
                  %p227 = scmp.ge.s32.totalorder %s226, 1
                  %s231 = sphi %s180, %s180
                  %s232 = sphi %s175, %s175
                $region61: #{_gcn_forward_impl.3} parent=50 // loop_header_branch
                  %229 = sbr.rel (%p227) target = $region65
                $region62: #{_gcn_forward_impl.3} parent=50 // loop_body
                  %v233 = vld [vmem:[%s231] sm:%s224]
                  %234 = vst [vmem:[%s232] sm:%s224] %v233
                  %v235 = vld [vmem:[%s231 + $0x8] sm:%s224]
                  %236 = vst [vmem:[%s232 + $0x4] sm:%s224] %v235
                  %v237 = vld [vmem:[%s231 + $0x10] sm:%s224]
                  %238 = vst [vmem:[%s232 + $0x8] sm:%s224] %v237
                  %v239 = vld [vmem:[%s231 + $0x18] sm:%s224]
                  %240 = vst [vmem:[%s232 + $0xc] sm:%s224] %v239
                  %v241 = vld [vmem:[%s231 + $0x20] sm:%s224]
                  %242 = vst [vmem:[%s232 + $0x10] sm:%s224] %v241
                  %v243 = vld [vmem:[%s231 + $0x28] sm:%s224]
                  %244 = vst [vmem:[%s232 + $0x14] sm:%s224] %v243
                  %v245 = vld [vmem:[%s231 + $0x30] sm:%s224]
                  %246 = vst [vmem:[%s232 + $0x18] sm:%s224] %v245
                  %v247 = vld [vmem:[%s231 + $0x38] sm:%s224]
                  %248 = vst [vmem:[%s232 + $0x1c] sm:%s224] %v247
                $region63: #{_gcn_forward_impl.3} parent=50 // loop_footer
                  %s230 = sadd.s32 1, %s226
                $region64: #{_gcn_forward_impl.3} parent=50 // loop_footer_branch
                  %225 = sbr.rel target = $region60
                $region65: #{_gcn_forward_impl.3} parent=50 // loop_exit
                  _
              $region51: #{_gcn_forward_impl.3} parent=35 // pred_fallthru
                _
            $region36: #{_gcn_forward_impl.3} parent=31 // pred_fallthru
              _
            // Predicated region
            $region37: #{_gcn_forward_impl.3} parent=31 // pred_check
              _
            $region38: #{_gcn_forward_impl.3} parent=31 // pred_check_branch
              %186 = sbr.rel (0) target = $region40
            $region39: #{_gcn_forward_impl.3} parent=31 // pred_region
              %s188 = ssub.s32 16, 1
              loop: start=0, step=1, limit=1
              $region41: #{_gcn_forward_impl.3} parent=39 // loop_pre_header
                _
              $region42: #{_gcn_forward_impl.3} parent=39 // loop_header
                %s190 = sphi 0, %s194
                %p191 = scmp.ge.s32.totalorder %s190, 1
                %s195 = sphi %s180, %s180
                %s196 = sphi %s175, %s175
              $region43: #{_gcn_forward_impl.3} parent=39 // loop_header_branch
                %193 = sbr.rel (%p191) target = $region47
              $region44: #{_gcn_forward_impl.3} parent=39 // loop_body
                %v197 = vld [vmem:[%s195] sm:%s188]
                %198 = vst [vmem:[%s196] sm:%s188] %v197
                %v199 = vld [vmem:[%s195 + $0x8] sm:%s188]
                %200 = vst [vmem:[%s196 + $0x4] sm:%s188] %v199
                %v201 = vld [vmem:[%s195 + $0x10] sm:%s188]
                %202 = vst [vmem:[%s196 + $0x8] sm:%s188] %v201
                %v203 = vld [vmem:[%s195 + $0x18] sm:%s188]
                %204 = vst [vmem:[%s196 + $0xc] sm:%s188] %v203
                %v205 = vld [vmem:[%s195 + $0x20] sm:%s188]
                %206 = vst [vmem:[%s196 + $0x10] sm:%s188] %v205
                %v207 = vld [vmem:[%s195 + $0x28] sm:%s188]
                %208 = vst [vmem:[%s196 + $0x14] sm:%s188] %v207
                %v209 = vld [vmem:[%s195 + $0x30] sm:%s188]
                %210 = vst [vmem:[%s196 + $0x18] sm:%s188] %v209
                %v211 = vld [vmem:[%s195 + $0x38] sm:%s188]
                %212 = vst [vmem:[%s196 + $0x1c] sm:%s188] %v211
              $region45: #{_gcn_forward_impl.3} parent=39 // loop_footer
                %s194 = sadd.s32 1, %s190
              $region46: #{_gcn_forward_impl.3} parent=39 // loop_footer_branch
                %189 = sbr.rel target = $region42
              $region47: #{_gcn_forward_impl.3} parent=39 // loop_exit
                _
            $region40: #{_gcn_forward_impl.3} parent=31 // pred_fallthru
              _
          $region32: #{_gcn_forward_impl.3} parent=27 // pred_fallthru
            _
          %249 = vnop
        $region28: #{_gcn_forward_impl.3} parent=23 // pred_fallthru
          _
        // Predicated region
        $region66: #{_gcn_forward_impl.3} parent=23 // pred_check
          %p250 = pneg %p70
        $region67: #{_gcn_forward_impl.3} parent=23 // pred_check_branch
          %252 = sbr.rel (%p250) target = $region69
        $region68: #{_gcn_forward_impl.3} parent=23 // pred_region
          %s253 = smul.u32 16, %s18
          %p254 = scmp.lt.s32.totalorder %s253, 31
          %s255 = scalar_select %p254, %s253, 31
          %s256 = smul.addr %s255, 4
          %s257 = scalar_lea.vmem %s1, %s256
          %s258 = smul.u32 16, %s18
        $region69: #{_gcn_forward_impl.3} parent=23 // pred_fallthru
          _
      $region24: #{_gcn_forward_impl.3} parent=5 // pred_fallthru
        _
      %p259 = scmp.le.s32.totalorder 1, %s10
      %p260 = scmp.lt.s32.totalorder %s10, 9
      %p261 = pnand %p259, %p260
      %p262 = pneg %p261
      // Predicated region
      $region70: #{_gcn_forward_impl.3} parent=5 // pred_check
        _
      $region71: #{_gcn_forward_impl.3} parent=5 // pred_check_branch
        %264 = sbr.rel (%p261) target = $region73
      $region72: #{_gcn_forward_impl.3} parent=5 // pred_region
        %s265 = ssub.s32 %s10, 1
        %s266 = sand.u32 %s37, 1
        %s267 = sand.u32 %s37, 1
        %s268 = smul.addr %s267, 32
        %s269 = scalar_lea.vmem [#allocation3], %s268
        // Predicated region
        $region74: #{_gcn_forward_impl.3} parent=72 // pred_check
          %p270 = pneg %p50
        $region75: #{_gcn_forward_impl.3} parent=72 // pred_check_branch
          %272 = sbr.rel (%p270) target = $region77
        $region76: #{_gcn_forward_impl.3} parent=72 // pred_region
          _
        $region77: #{_gcn_forward_impl.3} parent=72 // pred_fallthru
          _
        %s273 = sand.u32 %s37, 1
        %s274 = sand.u32 %s37, 1
        %s275 = smul.addr %s274, 32
        %s276 = scalar_lea.vmem [#allocation3], %s275
        %p277 = pneg %p50
        %p278 = pneg %p47
        %s279 = smul.u32 16, %s20
        %p280 = scmp.lt.s32.totalorder %s279, 31
        %s281 = scalar_select %p280, %s279, 31
        %s282 = smul.addr %s281, 4
        %s283 = scalar_lea.vmem %s1, %s282
        %p284 = pneg %p76
        %p285 = pneg %p73
        %p286 = pneg %p97
        %p287 = pneg %p94
        %p288 = pneg %p118
        %p289 = pneg %p115
        %p290 = pneg %p144
        %p291 = pneg %p141
        %s292 = smul.u32 8, %s19
        %p293 = scmp.lt.s32.totalorder %s292, 31
        %s294 = scalar_select %p293, %s292, 31
        %s295 = smul.addr %s294, 4
        %s296 = scalar_lea.vmem %s4, %s295
        %s297 = smul.u32 8, %s19
        %s298 = smul.u32 16, %s20
        %p299 = scmp.lt.s32.totalorder %s298, 31
        %s300 = scalar_select %p299, %s298, 31
        %s301 = smul.addr %s300, 4
        %s302 = scalar_lea.vmem %s1, %s301
        %s303 = smul.u32 16, %s20
        %s304 = smul.u32 8, %s19
        %p305 = scmp.lt.s32.totalorder %s304, 31
        %s306 = scalar_select %p305, %s304, 31
        %s307 = smul.addr %s306, 4
        %s308 = scalar_lea.vmem %s4, %s307
        %s309 = smul.u32 8, %s19
        %p310 = scmp.eq.s32.totalorder %s20, 0
        // Predicated region
        $region78: #{_gcn_forward_impl.3} parent=72 // pred_check
          %p311 = pneg %p310
        $region79: #{_gcn_forward_impl.3} parent=72 // pred_check_branch
          %313 = sbr.rel (%p311) target = $region81
        $region80: #{_gcn_forward_impl.3} parent=72 // pred_region
          %314 = vst [vmem:[#allocation2] sm:$0xff] 0.0
          %315 = vst [vmem:[#allocation2 + $0x8] sm:$0xff] 0.0
          %316 = vst [vmem:[#allocation2 + $0x10] sm:$0xff] 0.0
          %317 = vst [vmem:[#allocation2 + $0x18] sm:$0xff] 0.0
          %318 = vst [vmem:[#allocation2 + $0x20] sm:$0xff] 0.0
          %319 = vst [vmem:[#allocation2 + $0x28] sm:$0xff] 0.0
          %320 = vst [vmem:[#allocation2 + $0x30] sm:$0xff] 0.0
          %321 = vst [vmem:[#allocation2 + $0x38] sm:$0xff] 0.0
        $region81: #{_gcn_forward_impl.3} parent=72 // pred_fallthru
          _
        %v322 = vld [vmem:[#allocation2] sm:$0xff]
        %v323 = vld [vmem:[#allocation2 + $0x8] sm:$0xff]
        %v324 = vld [vmem:[#allocation2 + $0x10] sm:$0xff]
        %v325 = vld [vmem:[#allocation2 + $0x18] sm:$0xff]
        %v326 = vld [vmem:[#allocation2 + $0x20] sm:$0xff]
        %v327 = vld [vmem:[#allocation2 + $0x28] sm:$0xff]
        %v328 = vld [vmem:[#allocation2 + $0x30] sm:$0xff]
        %v329 = vld [vmem:[#allocation2 + $0x38] sm:$0xff]
        %v330 = vld [vmem:[%s269] sm:$0xf]
        %v331 = vld [vmem:[%s269 + $0x4] sm:$0xf]
        %v332 = vld [vmem:[%s269 + $0x8] sm:$0xf]
        %v333 = vld [vmem:[%s269 + $0xc] sm:$0xf]
        %v334 = vld [vmem:[%s269 + $0x10] sm:$0xf]
        %v335 = vld [vmem:[%s269 + $0x14] sm:$0xf]
        %v336 = vld [vmem:[%s269 + $0x18] sm:$0xf]
        %v337 = vld [vmem:[%s269 + $0x1c] sm:$0xf]
        %v338 = vld [vmem:[%s302] sm:$0xf]
        %v339 = vld [vmem:[%s302 + $0x4] sm:$0xf]
        %v340 = vld [vmem:[%s302 + $0x8] sm:$0xf]
        %v341 = vld [vmem:[%s302 + $0xc] sm:$0xf]
        %v342 = vld [vmem:[%s302 + $0x10] sm:$0xf]
        %v343 = vld [vmem:[%s302 + $0x14] sm:$0xf]
        %v344 = vld [vmem:[%s302 + $0x18] sm:$0xf]
        %v345 = vld [vmem:[%s302 + $0x1c] sm:$0xf]
        %v346 = vld [vmem:[%s302 + $0x20] sm:$0xf]
        %v347 = vld [vmem:[%s302 + $0x24] sm:$0xf]
        %v348 = vld [vmem:[%s302 + $0x28] sm:$0xf]
        %v349 = vld [vmem:[%s302 + $0x2c] sm:$0xf]
        %v350 = vld [vmem:[%s302 + $0x30] sm:$0xf]
        %v351 = vld [vmem:[%s302 + $0x34] sm:$0xf]
        %v352 = vld [vmem:[%s302 + $0x38] sm:$0xf]
        %v353 = vld [vmem:[%s302 + $0x3c] sm:$0xf]
        %v362 = vunpack.c.l.b16 %v330
        %v363 = vunpack.c.l.b16 %v331
        %v364 = vunpack.c.l.b16 %v332
        %v365 = vunpack.c.l.b16 %v333
        %v366 = vunpack.c.l.b16 %v334
        %v367 = vunpack.c.l.b16 %v335
        %v368 = vunpack.c.l.b16 %v336
        %v369 = vunpack.c.l.b16 %v337
        %v370 = vpack.c.b16 %v363, %v362
        %v371 = vpack.c.b16 %v365, %v364
        %v372 = vpack.c.b16 %v367, %v366
        %v373 = vpack.c.b16 %v369, %v368
        %v394 = vunpack.c.l.b16 %v338
        %v395 = vunpack.c.l.b16 %v339
        %v396 = vunpack.c.l.b16 %v340
        %v397 = vunpack.c.l.b16 %v341
        %v398 = vunpack.c.l.b16 %v342
        %v399 = vunpack.c.l.b16 %v343
        %v400 = vunpack.c.l.b16 %v344
        %v401 = vunpack.c.l.b16 %v345
        %v402 = vunpack.c.l.b16 %v346
        %v403 = vunpack.c.l.b16 %v347
        %v404 = vunpack.c.l.b16 %v348
        %v405 = vunpack.c.l.b16 %v349
        %v406 = vunpack.c.l.b16 %v350
        %v407 = vunpack.c.l.b16 %v351
        %v408 = vunpack.c.l.b16 %v352
        %v409 = vunpack.c.l.b16 %v353
        %v410 = vpack.c.b16 %v395, %v394
        %v411 = vpack.c.b16 %v397, %v396
        %v412 = vpack.c.b16 %v399, %v398
        %v413 = vpack.c.b16 %v401, %v400
        %v414 = vpack.c.b16 %v403, %v402
        %v415 = vpack.c.b16 %v405, %v404
        %v416 = vpack.c.b16 %v407, %v406
        %v417 = vpack.c.b16 %v409, %v408
        %426 = vmatpush.bf16.msra.mxu0 %v417
        %427 = vmatpush.bf16.msra.mxu0 %v416
        %428 = vmatpush.bf16.msra.mxu0 %v415
        %429 = vmatpush.bf16.msra.mxu0 %v414
        %430 = vmatpush.bf16.msra.mxu0 %v413
        %431 = vmatpush.bf16.msra.mxu0 %v412
        %432 = vmatpush.bf16.msra.mxu0 %v411
        %433 = vmatpush.bf16.msra.mxu0 %v410
        %434 = vmatmul.bf16.gmra.mxu0 %v370
        %v435 = vpop.f32.mrf.mxu0
        %v436 = vadd.f32 0.0, %v435
        %v437 = vpop.f32.mrf.mxu0
        %v438 = vadd.f32 0.0, %v437
        %439 = vmatmul.bf16.gmra.mxu0 %v371
        %v440 = vpop.f32.mrf.mxu0
        %v441 = vadd.f32 0.0, %v440
        %v442 = vpop.f32.mrf.mxu0
        %v443 = vadd.f32 0.0, %v442
        %444 = vmatmul.bf16.gmra.mxu0 %v372
        %v445 = vpop.f32.mrf.mxu0
        %v446 = vadd.f32 0.0, %v445
        %v447 = vpop.f32.mrf.mxu0
        %v448 = vadd.f32 0.0, %v447
        %449 = vmatmul.bf16.gmra.mxu0 %v373
        %v450 = vpop.f32.mrf.mxu0
        %v451 = vadd.f32 0.0, %v450
        %v452 = vpop.f32.mrf.mxu0
        %v453 = vadd.f32 0.0, %v452
        %454 = vdwg.mxu0
        %v455 = vadd.f32 %v322, %v436
        %v456 = vadd.f32 %v323, %v438
        %v457 = vadd.f32 %v324, %v441
        %v458 = vadd.f32 %v325, %v443
        %v459 = vadd.f32 %v326, %v446
        %v460 = vadd.f32 %v327, %v448
        %v461 = vadd.f32 %v328, %v451
        %v462 = vadd.f32 %v329, %v453
        %463 = vst [vmem:[#allocation2] sm:$0xff] %v455
        %464 = vst [vmem:[#allocation2 + $0x8] sm:$0xff] %v456
        %465 = vst [vmem:[#allocation2 + $0x10] sm:$0xff] %v457
        %466 = vst [vmem:[#allocation2 + $0x18] sm:$0xff] %v458
        %467 = vst [vmem:[#allocation2 + $0x20] sm:$0xff] %v459
        %468 = vst [vmem:[#allocation2 + $0x28] sm:$0xff] %v460
        %469 = vst [vmem:[#allocation2 + $0x30] sm:$0xff] %v461
        %470 = vst [vmem:[#allocation2 + $0x38] sm:$0xff] %v462
        %p471 = scmp.eq.s32.totalorder %s20, 1
        // Predicated region
        $region82: #{_gcn_forward_impl.3} parent=72 // pred_check
          %p472 = pneg %p471
        $region83: #{_gcn_forward_impl.3} parent=72 // pred_check_branch
          %474 = sbr.rel (%p472) target = $region85
        $region84: #{_gcn_forward_impl.3} parent=72 // pred_region
          %v475 = vld [vmem:[#allocation2] sm:$0xff]
          %v476 = vld [vmem:[#allocation2 + $0x8] sm:$0xff]
          %v477 = vld [vmem:[#allocation2 + $0x10] sm:$0xff]
          %v478 = vld [vmem:[#allocation2 + $0x18] sm:$0xff]
          %v479 = vld [vmem:[#allocation2 + $0x20] sm:$0xff]
          %v480 = vld [vmem:[#allocation2 + $0x28] sm:$0xff]
          %v481 = vld [vmem:[#allocation2 + $0x30] sm:$0xff]
          %v482 = vld [vmem:[#allocation2 + $0x38] sm:$0xff]
          %v483 = vld [vmem:[%s2] sm:$0xff]
          %v484 = vld [vmem:[%s2 + $0x8] sm:$0xff]
          %v485 = vld [vmem:[%s2 + $0x10] sm:$0xff]
          %v486 = vld [vmem:[%s2 + $0x18] sm:$0xff]
          %v487 = vld [vmem:[%s2 + $0x20] sm:$0xff]
          %v488 = vld [vmem:[%s2 + $0x28] sm:$0xff]
          %v489 = vld [vmem:[%s2 + $0x30] sm:$0xff]
          %v490 = vld [vmem:[%s2 + $0x38] sm:$0xff]
          %v491 = vld [vmem:[%s2 + $0x40] sm:$0xff]
          %v492 = vld [vmem:[%s2 + $0x48] sm:$0xff]
          %v493 = vld [vmem:[%s2 + $0x50] sm:$0xff]
          %v494 = vld [vmem:[%s2 + $0x58] sm:$0xff]
          %v495 = vld [vmem:[%s2 + $0x60] sm:$0xff]
          %v496 = vld [vmem:[%s2 + $0x68] sm:$0xff]
          %v497 = vld [vmem:[%s2 + $0x70] sm:$0xff]
          %v498 = vld [vmem:[%s2 + $0x78] sm:$0xff]
          %v499 = vld [vmem:[%s3] sm:$0x1]
          %v501 = vperm.slane %v499, 0
          %503 = vmatpush.msra.mxu0 %v498
          %504 = vmatpush.msra.mxu0 %v497
          %505 = vmatpush.msra.mxu0 %v496
          %506 = vmatpush.msra.mxu0 %v495
          %507 = vmatpush.msra.mxu0 %v494
          %508 = vmatpush.msra.mxu0 %v493
          %509 = vmatpush.msra.mxu0 %v492
          %510 = vmatpush.msra.mxu0 %v491
          %511 = vmatpush.msra.mxu0 %v490
          %512 = vmatpush.msra.mxu0 %v489
          %513 = vmatpush.msra.mxu0 %v488
          %514 = vmatpush.msra.mxu0 %v487
          %515 = vmatpush.msra.mxu0 %v486
          %516 = vmatpush.msra.mxu0 %v485
          %517 = vmatpush.msra.mxu0 %v484
          %518 = vmatpush.msra.mxu0 %v483
          %519 = vmatmul.f32.gmra.mxu0 %v475
          %v520 = vpop.f32.mrf.mxu0
          %v521 = vadd.f32 %v501, %v520
          %522 = vmatmul.f32.gmra.mxu0 %v476
          %v523 = vpop.f32.mrf.mxu0
          %v524 = vadd.f32 %v501, %v523
          %525 = vmatmul.f32.gmra.mxu0 %v477
          %v526 = vpop.f32.mrf.mxu0
          %v527 = vadd.f32 %v501, %v526
          %528 = vmatmul.f32.gmra.mxu0 %v478
          %v529 = vpop.f32.mrf.mxu0
          %v530 = vadd.f32 %v501, %v529
          %531 = vmatmul.f32.gmra.mxu0 %v479
          %v532 = vpop.f32.mrf.mxu0
          %v533 = vadd.f32 %v501, %v532
          %534 = vmatmul.f32.gmra.mxu0 %v480
          %v535 = vpop.f32.mrf.mxu0
          %v536 = vadd.f32 %v501, %v535
          %537 = vmatmul.f32.gmra.mxu0 %v481
          %v538 = vpop.f32.mrf.mxu0
          %v539 = vadd.f32 %v501, %v538
          %540 = vmatmul.f32.gmra.mxu0 %v482
          %v541 = vpop.f32.mrf.mxu0
          %v542 = vadd.f32 %v501, %v541
          %543 = vdwg.mxu0
          %v544 = vtanh.pop %v521
          %v545 = vtanh.pop %v524
          %v546 = vtanh.pop %v527
          %v547 = vtanh.pop %v530
          %v548 = vtanh.pop %v533
          %v549 = vtanh.pop %v536
          %v550 = vtanh.pop %v539
          %v551 = vtanh.pop %v542
          %v552 = vpack.c.bf16 %v544, %v544
          %v553 = vpack.c.bf16 %v545, %v545
          %v554 = vpack.c.bf16 %v546, %v546
          %v555 = vpack.c.bf16 %v547, %v547
          %v556 = vpack.c.bf16 %v548, %v548
          %v557 = vpack.c.bf16 %v549, %v549
          %v558 = vpack.c.bf16 %v550, %v550
          %v559 = vpack.c.bf16 %v551, %v551
          %560 = vst [vmem:[%s308] sm:$0xf] %v552
          %561 = vst [vmem:[%s308 + $0x4] sm:$0xf] %v553
          %562 = vst [vmem:[%s308 + $0x8] sm:$0xf] %v554
          %563 = vst [vmem:[%s308 + $0xc] sm:$0xf] %v555
          %564 = vst [vmem:[%s308 + $0x10] sm:$0xf] %v556
          %565 = vst [vmem:[%s308 + $0x14] sm:$0xf] %v557
          %566 = vst [vmem:[%s308 + $0x18] sm:$0xf] %v558
          %567 = vst [vmem:[%s308 + $0x1c] sm:$0xf] %v559
        $region85: #{_gcn_forward_impl.3} parent=72 // pred_fallthru
          _
        %s568 = smul.u32 8, %s19
        %p569 = scmp.lt.s32.totalorder %s568, 31
        %s570 = scalar_select %p569, %s568, 31
        %s571 = smul.addr %s570, 4
        %s572 = scalar_lea.vmem %s4, %s571
        // Predicated region
        $region86: #{_gcn_forward_impl.3} parent=72 // pred_check
          %p573 = pneg %p141
        $region87: #{_gcn_forward_impl.3} parent=72 // pred_check_branch
          %575 = sbr.rel (%p573) target = $region89
        $region88: #{_gcn_forward_impl.3} parent=72 // pred_region
          %s576 = smul.u32 8, %s19
        $region89: #{_gcn_forward_impl.3} parent=72 // pred_fallthru
          _
      $region73: #{_gcn_forward_impl.3} parent=5 // pred_fallthru
        _
      %p577 = scmp.le.s32.totalorder 2, %s10
      // Predicated region
      $region90: #{_gcn_forward_impl.3} parent=5 // pred_check
        %p578 = pneg %p577
      $region91: #{_gcn_forward_impl.3} parent=5 // pred_check_branch
        %580 = sbr.rel (%p578) target = $region93
      $region92: #{_gcn_forward_impl.3} parent=5 // pred_region
        %s581 = ssub.s32 %s10, 2
        // Predicated region
        $region94: #{_gcn_forward_impl.3} parent=92 // pred_check
          %p582 = pneg %p147
        $region95: #{_gcn_forward_impl.3} parent=92 // pred_check_branch
          %584 = sbr.rel (%p582) target = $region97
        $region96: #{_gcn_forward_impl.3} parent=92 // pred_region
          %s585 = smul.u32 8, %s21
          %p586 = scmp.lt.s32.totalorder %s585, 31
          %s587 = scalar_select %p586, %s585, 31
          %s588 = smul.addr %s587, 4
          %s589 = scalar_lea.vmem %s4, %s588
        $region97: #{_gcn_forward_impl.3} parent=92 // pred_fallthru
          _
      $region93: #{_gcn_forward_impl.3} parent=5 // pred_fallthru
        _
    $region6: #{_gcn_forward_impl.3} parent=1 // loop_footer
      %s14 = sadd.s32 1, %s10
    $region7: #{_gcn_forward_impl.3} parent=1 // loop_footer_branch
      %9 = sbr.rel target = $region3
    $region8: #{_gcn_forward_impl.3} parent=1 // loop_exit
      _

</llo_original>
